<compile_context>
chip_gen: v7x
topology: tpu7x:2x2x1
jax: 0.10.0
libtpu: 0.0.40
codegen_flags: <defaults>
</compile_context>

<pallas_src>
import functools

import jax
import jax.numpy as jnp
from jax.experimental import pallas as pl
from jax.experimental.pallas import tpu as pltpu


_VMEM = pl.BlockSpec(memory_space=pltpu.MemorySpace.VMEM)
_SMEM = pl.BlockSpec(memory_space=pltpu.MemorySpace.SMEM)


# ----------------------------------------------------------------------------
# Pallas kernels
# ----------------------------------------------------------------------------
def _load_rhs_kernel(xh_ref, w2_ref, p_ref, rhs_ref, *, num_gaussians, num_quad):
    """Forcing-function quadrature + in-kernel RHS scatter.

    xh_ref : (K+1, N) rows 0..K-1 = quadrature abscissae (cells on lanes, the
             last cell column is a dummy with h = 0), row K = per-cell spacing h
    w2_ref : (2, K)  [phi * trap_w ; reversed_phi * trap_w]
    p_ref  : (4G,)   SMEM scalars  [c_i ..., s_i^2 ..., 1/s_i^2 ..., 1/s_i^4 ...]
    rhs_ref: (1, N)  assembled load vector: rhs[n] = left[n-1] + right[n]
    """
    K = num_quad
    G = num_gaussians
    x = xh_ref[0:K, :]                                   # (K, N)
    h = xh_ref[K:K + 1, :]                               # (1, N)

    fval = jnp.zeros_like(x)
    for i in range(G):
        ci = p_ref[i]
        s2 = p_ref[G + i]
        inv_s2 = p_ref[2 * G + i]
        inv_s4 = p_ref[3 * G + i]
        d = x - ci
        d2 = d * d
        # no vector divides: scalar reciprocals precomputed on the host
        fval = fval + (-2.0) * jnp.exp(-d2 * inv_s2) * (s2 - 2.0 * d2) * inv_s4

    # one MXU matmul fuses both trapezoid reductions over the K quad points
    lr = jnp.dot(w2_ref[...], fval, preferred_element_type=jnp.float32)  # (2, N)
    lr = lr * h                                          # dummy cell -> 0
    left = lr[0:1, :]
    right = lr[1:2, :]

    Nc = rhs_ref.shape[1]
    # rhs[0] = right[0];  rhs[n] = left[n-1] + right[n]  (right[N-1] == 0)
    rhs_ref[:, 0:1] = right[:, 0:1]
    rhs_ref[:, 1:Nc] = left[:, 0:Nc - 1] + right[:, 1:Nc]


def _soln_loss_kernel(bounds_ref, table_ref, qwu_ref, sol_ref, loss_ref):
    """Piecewise-linear interpolation + L2 error; quadrature axis on lanes.

    bounds_ref : (2N, 1) rows 0..N-1 = lo (lo[0]=-1), rows N..2N-1 = hi (hi[N-1]=2)
    table_ref  : (8, N)  rows = [b = extended - grads*mesh, grads, 0, ...]
    qwu_ref    : (8, Q)  rows = [eval quad points, trapezoid weights, u_true, 0...]
    sol_ref    : (1, Q)  interpolated FEM solution (lane-dense, Q % 128 == 0)
    loss_ref   : (1, 1)  trapz(|sol - u_true|^2)
    """
    Nn = table_ref.shape[1]
    q = qwu_ref[0:1, :]                                          # (1, Q)
    w = qwu_ref[1:2, :]                                          # (1, Q)
    u_true = qwu_ref[2:3, :]                                     # (1, Q)
    lo = bounds_ref[0:Nn, :]                                     # (N, 1)
    hi = bounds_ref[Nn:2 * Nn, :]                                # (N, 1)

    # exactly reproduces clamp(searchsorted(mesh, q, right=False) - 1, 0, N-1)
    onehot = ((lo < q) & (q <= hi)).astype(jnp.float32)          # (N, Q)

    # fused gather of b[idx], g[idx]: one MXU matmul
    sel = jnp.dot(table_ref[...], onehot, preferred_element_type=jnp.float32)  # (8, Q)
    sol = sel[0:1, :] + sel[1:2, :] * q                          # b + g*q  (1, Q)
    sol_ref[...] = sol

    err = sol - u_true
    loss_ref[...] = jnp.sum(err * err * w).reshape(1, 1)


# ----------------------------------------------------------------------------
# Pallas wrappers
# ----------------------------------------------------------------------------
def _load_rhs_pallas(xh, w2, params):
    Kp1, Nc = xh.shape
    kernel = functools.partial(_load_rhs_kernel,
                               num_gaussians=params.shape[0] // 4,
                               num_quad=Kp1 - 1)
    return pl.pallas_call(
        kernel,
        out_shape=jax.ShapeDtypeStruct((1, Nc), jnp.float32),
        in_specs=[_VMEM, _VMEM, _SMEM],
        out_specs=_VMEM,
    )(xh, w2, params)


def _soln_loss_pallas(bounds, table, qwu):
    Q = qwu.shape[1]
    return pl.pallas_call(
        _soln_loss_kernel,
        out_shape=(jax.ShapeDtypeStruct((1, Q), jnp.float32),
                   jax.ShapeDtypeStruct((1, 1), jnp.float32)),
        in_specs=[_VMEM, _VMEM, _VMEM],
        out_specs=(_VMEM, _VMEM),
    )(bounds, table, qwu)


# ---- pure-JAX references (backward pass of custom_vjp; mirror the kernels) ---
def _u_true_ref(x, c, s):
    u = jnp.zeros_like(x)
    for i in range(c.shape[0]):
        u = u + jnp.exp(-((x - c[i]) ** 2) / (s[i] * s[i]))
    return u


def _load_rhs_ref(xh, w2, params):
    G = params.shape[0] // 4
    K = xh.shape[0] - 1
    x = xh[0:K, :]
    h = xh[K:K + 1, :]
    fval = jnp.zeros_like(x)
    for i in range(G):
        d = x - params[i]
        d2 = d * d
        fval = fval + (-2.0) * jnp.exp(-d2 * params[2 * G + i]) \
            * (params[G + i] - 2.0 * d2) * params[3 * G + i]
    lr = jnp.dot(w2, fval) * h
    left, right = lr[0:1, :], lr[1:2, :]
    Nc = xh.shape[1]
    rhs = jnp.zeros((1, Nc), jnp.float32)
    rhs = rhs.at[:, 0:1].set(right[:, 0:1])
    rhs = rhs.at[:, 1:Nc].set(left[:, 0:Nc - 1] + right[:, 1:Nc])
    return rhs


def _soln_loss_ref(bounds, table, qwu):
    Nn = table.shape[1]
    q = qwu[0:1, :]
    w = qwu[1:2, :]
    u_true = qwu[2:3, :]
    lo = bounds[0:Nn, :]
    hi = bounds[Nn:2 * Nn, :]
    onehot = ((lo < q) & (q <= hi)).astype(jnp.float32)
    sel = jnp.dot(table, onehot)
    sol = sel[0:1, :] + sel[1:2, :] * q
    err = sol - u_true
    loss = jnp.sum(err * err * w).reshape(1, 1)
    return sol, loss


# ---- custom_vjp: forward = Pallas, backward = VJP of the JAX reference -------
@jax.custom_vjp
def load_rhs_core(xh, w2, params):
    return _load_rhs_pallas(xh, w2, params)


def _load_rhs_fwd(xh, w2, params):
    return _load_rhs_pallas(xh, w2, params), (xh, w2, params)


def _load_rhs_bwd(res, g):
    return jax.vjp(_load_rhs_ref, *res)[1](g)


load_rhs_core.defvjp(_load_rhs_fwd, _load_rhs_bwd)


@jax.custom_vjp
def soln_loss_core(bounds, table, qwu):
    return _soln_loss_pallas(bounds, table, qwu)


def _soln_loss_fwd(bounds, table, qwu):
    return _soln_loss_pallas(bounds, table, qwu), (bounds, table, qwu)


def _soln_loss_bwd(res, g):
    return jax.vjp(_soln_loss_ref, *res)[1](g)


soln_loss_core.defvjp(_soln_loss_fwd, _soln_loss_bwd)


# ----------------------------------------------------------------------------
# FEM glue (tiny tensors: stiffness assembly, linear solve) — plain JAX
# ----------------------------------------------------------------------------
def _trapz(y, x, axis=-1):
    dx = jnp.diff(x, axis=axis)
    n = y.shape[axis]
    y0 = jnp.take(y, jnp.arange(n - 1), axis=axis)
    y1 = jnp.take(y, jnp.arange(1, n), axis=axis)
    return jnp.sum(0.5 * (y0 + y1) * dx, axis=axis)


def build_stiffness_matrix(mesh_points, stiff_quad_points=3):
    k = stiff_quad_points
    mesh_diffs = jnp.diff(mesh_points)
    L_start = mesh_points[:-1][:, None]
    steps = jnp.arange(k + 1, dtype=jnp.float32)[None, :]
    mesh_quad = L_start + steps * mesh_diffs[:, None] / k
    a = mesh_points[:-1]
    b = mesh_points[1:]
    L_dphi = jnp.repeat((1.0 / (b - a))[:, None], k + 1, axis=1)
    R_dphi = -L_dphi
    off_diags = _trapz(L_dphi * R_dphi, mesh_quad, axis=1)
    diag_LHS = _trapz(L_dphi[:-1] ** 2, mesh_quad[:-1], axis=1)
    diag_RHS = _trapz(R_dphi[1:] ** 2, mesh_quad[1:], axis=1)
    internal_diag = diag_LHS + diag_RHS
    LHS = _trapz(L_dphi[0] ** 2, mesh_quad[0], axis=0)
    RHS = _trapz(R_dphi[-1] ** 2, mesh_quad[-1], axis=0)
    N = mesh_points.shape[0]
    A = jnp.zeros((N, N), dtype=jnp.float32)
    A = A.at[1:-1, 1:-1].set(jnp.diag(internal_diag))
    A = A + jnp.diag(off_diags, 1) + jnp.diag(off_diags, -1)
    A = A.at[0, 0].set(LHS)
    A = A.at[-1, -1].set(RHS)
    return A


def build_load_vector(mesh, params, load_quad_points):
    k = load_quad_points
    diffs = jnp.diff(mesh)                                            # (N-1,)
    steps = (jnp.arange(k, dtype=jnp.float32) / (k - 1))[:, None]     # (K, 1)
    x = mesh[:-1][None, :] + steps * diffs[None, :]                   # (K, N-1)
    h = diffs / (k - 1)                                               # (N-1,)
    # dummy last cell with h = 0 -> its contribution vanishes; lets the kernel
    # assemble the full (1, N) RHS with a shifted add (no third slice store).
    x_pad = jnp.concatenate([x, jnp.zeros((k, 1), jnp.float32)], axis=1)   # (K, N)
    h_pad = jnp.concatenate([h, jnp.zeros((1,), jnp.float32)])[None, :]    # (1, N)
    xh = jnp.concatenate([x_pad, h_pad], axis=0).astype(jnp.float32)       # (K+1, N)
    tw = jnp.ones((k,), jnp.float32).at[0].set(0.5).at[-1].set(0.5)
    phi = jnp.arange(k, dtype=jnp.float32) / (k - 1)
    w2 = jnp.stack([phi * tw, phi[::-1] * tw], axis=0)                # (2, K)
    rhs = load_rhs_core(xh, w2, params)                               # (1, N)
    return rhs[0]                                                     # (N,)


def fem_forward(mesh_points, qwu, params, c, s, opt):
    N = mesh_points.shape[0]
    A = build_stiffness_matrix(mesh_points, opt['stiff_quad_points'])
    A_int = -A[1:-1, 1:-1]
    BC1 = _u_true_ref(mesh_points[0:1], c, s)                         # (1,)
    BC2 = _u_true_ref(mesh_points[-1:], c, s)                         # (1,)
    RHS = build_load_vector(mesh_points, params, opt['load_quad_points'])  # (N,)
    RHS_int = RHS[1:-1][:, None]
    RHS_int = RHS_int.at[0].add(BC1 * A[0, 1])
    RHS_int = RHS_int.at[-1].add(A[-1, -2] * BC2)
    coeffs = jnp.linalg.solve(A_int, RHS_int)                         # (N-2, 1)

    extended = jnp.concatenate([BC1, coeffs[:, 0], BC2])              # (N,)
    gradients = (extended[1:] - extended[:-1]) / (mesh_points[1:] - mesh_points[:-1])
    grads_pad = jnp.concatenate([gradients, jnp.zeros((1,), jnp.float32)])  # (N,)

    # interpolation folded into 2 table rows: sol = b[idx] + g[idx]*q
    b_row = extended - grads_pad * mesh_points
    table = (jnp.zeros((8, N), jnp.float32)
             .at[0, :].set(b_row)
             .at[1, :].set(grads_pad))

    # interval-bound rows (sentinels reproduce the idx clamp at q=0 / q=1)
    # TODO(synk): no guard if SGD drives internal mesh points out of order.
    lo = jnp.concatenate([jnp.full((1,), -1.0, jnp.float32), mesh_points[1:]])
    hi = jnp.concatenate([mesh_points[1:], jnp.full((1,), 2.0, jnp.float32)])
    bounds = jnp.concatenate([lo, hi])[:, None]                       # (2N, 1)

    sol_row, loss11 = soln_loss_core(bounds, table, qwu)
    return coeffs, sol_row[0], loss11[0, 0]


# ----------------------------------------------------------------------------
# Training loop (SGD on internal mesh points, lax.scan inside one jit)
# ----------------------------------------------------------------------------
def train_step_vec(opt, num_meshpoints, lr, epochs, c, s):
    # TODO(synk): only the 'internal' mesh_params branch is implemented
    # (the 'all' branch with in-place min/max renormalization is not).
    N = num_meshpoints
    Q = opt['eval_quad_points']   # keep a multiple of 128 (lane-dense sol/one-hot)
    quad_points = jnp.linspace(0.0, 1.0, Q).astype(jnp.float32)
    dq = jnp.diff(quad_points)
    trap_w = (jnp.zeros_like(quad_points)
              .at[:-1].add(0.5 * dq)
              .at[1:].add(0.5 * dq))
    internal0 = jnp.linspace(1.0 / (N - 1), 1.0 - 1.0 / (N - 1), N - 2).astype(jnp.float32)

    @jax.jit
    def run(internal_init, cc, ss):
        # epoch-invariant precompute (hoisted out of the kernels and the scan):
        s2 = ss * ss
        inv_s2 = 1.0 / s2
        params = jnp.concatenate([cc, s2, inv_s2, inv_s2 * inv_s2]).astype(jnp.float32)
        u_true_row = _u_true_ref(quad_points, cc, ss)                 # (Q,)
        qwu = (jnp.zeros((8, Q), jnp.float32)
               .at[0, :].set(quad_points)
               .at[1, :].set(trap_w)
               .at[2, :].set(u_true_row))

        def loss_and_aux(internal_pts):
            mesh = jnp.concatenate([jnp.zeros((1,), jnp.float32), internal_pts,
                                    jnp.ones((1,), jnp.float32)])
            coeffs, sol, loss = fem_forward(mesh, qwu, params, cc, ss, opt)
            return loss, (coeffs, sol)

        vg = jax.value_and_grad(loss_and_aux, has_aux=True)

        def step(internal, _):
            (loss, (coeffs, sol)), grad = vg(internal)
            return internal - lr * grad, (loss, coeffs, sol)   # plain SGD

        internal_final, (_losses, coeffs_hist, sol_hist) = jax.lax.scan(
            step, internal_init, xs=None, length=epochs)
        mesh_final = jnp.concatenate([jnp.zeros((1,), jnp.float32), internal_final,
                                      jnp.ones((1,), jnp.float32)])
        # PyTorch parity: coeffs/sol come from the last forward pass (pre-update
        # mesh); the returned mesh includes the final SGD update.
        return coeffs_hist[-1], mesh_final, sol_hist[-1]

    coeffs, mesh_points, sol = run(internal0, c, s)
    return coeffs, mesh_points, sol


class BackFEM1DPallas:
    """JAX/Pallas equivalent of backFEM_1D.forward (no plotting / printing)."""

    def __init__(self, opt):
        self.opt = opt
        self.num_meshpoints = opt['mesh_dims'][0]
        self.eval_quad_points = opt['eval_quad_points']
        self.lr = opt['lr']
        self.epochs = opt['epochs']

    def forward(self, centers, scales):
        coeffs, mesh_points, sol = train_step_vec(
            self.opt, self.num_meshpoints, self.lr, self.epochs,
            centers.astype(jnp.float32), scales.astype(jnp.float32))
        return coeffs, mesh_points, sol


# ----------------------------------------------------------------------------
if __name__ == "__main__":
    key = jax.random.PRNGKey(0)
    k1, k2 = jax.random.split(key)
    num_gaussians = 2
    # deterministic "data.pde_params": gaussian centers / scales
    centers = jax.random.uniform(k1, (num_gaussians,), minval=0.25, maxval=0.75).astype(jnp.float32)
    scales = jax.random.uniform(k2, (num_gaussians,), minval=0.08, maxval=0.20).astype(jnp.float32)

    opt = {
        'mesh_dims': (16,),          # num_meshpoints
        'eval_quad_points': 128,     # keep a multiple of 128 (lane-dense)
        'load_quad_points': 8,
        'stiff_quad_points': 3,
        'lr': 0.01,
        'epochs': 3,
        'mesh_params': 'internal',
        'show_train_evol_plots': False,
        'show_mesh_evol_plots': False,
    }

    model = BackFEM1DPallas(opt)
    coeffs, mesh_points, sol = model.forward(centers, scales)
    jax.block_until_ready((coeffs, mesh_points, sol))

    assert coeffs.shape == (opt['mesh_dims'][0] - 2, 1)
    assert mesh_points.shape == (opt['mesh_dims'][0],)
    assert sol.shape == (opt['eval_quad_points'],)
    assert bool(jnp.all(jnp.isfinite(coeffs))) and bool(jnp.all(jnp.isfinite(sol)))
    print("KERNEL_OK")
</pallas_src>

<mosaic_0001>
module attributes {stable_mosaic.version = 11 : i64} {
  func.func @_load_rhs_kernel(%arg0: memref<9x16xf32, #tpu.memory_space<vmem>>, %arg1: memref<2x8xf32, #tpu.memory_space<vmem>>, %arg2: memref<8xf32, #tpu.memory_space<smem>>, %arg3: memref<1x16xf32, #tpu.memory_space<vmem>>) attributes {dimension_semantics = [], scalar_prefetch = 0 : i64, scratch_operands = 0 : i64, tpu.core_type = #tpu.core_type<tc>} {
    %c0 = arith.constant 0 : index
    %c0_0 = arith.constant 0 : index
    %0 = vector.load %arg0[%c0, %c0_0] : memref<9x16xf32, #tpu.memory_space<vmem>>, vector<8x16xf32>
    %c8 = arith.constant 8 : index
    %c0_1 = arith.constant 0 : index
    %1 = vector.load %arg0[%c8, %c0_1] : memref<9x16xf32, #tpu.memory_space<vmem>>, vector<1x16xf32>
    %cst = arith.constant 0.000000e+00 : f32
    %2 = vector.broadcast %cst : f32 to vector<8x16xf32>
    %c0_2 = arith.constant 0 : index
    %3 = memref.load %arg2[%c0_2] : memref<8xf32, #tpu.memory_space<smem>>
    %c2 = arith.constant 2 : index
    %4 = memref.load %arg2[%c2] : memref<8xf32, #tpu.memory_space<smem>>
    %c4 = arith.constant 4 : index
    %5 = memref.load %arg2[%c4] : memref<8xf32, #tpu.memory_space<smem>>
    %c6 = arith.constant 6 : index
    %6 = memref.load %arg2[%c6] : memref<8xf32, #tpu.memory_space<smem>>
    %7 = vector.broadcast %3 : f32 to vector<8x16xf32>
    %8 = arith.subf %0, %7 : vector<8x16xf32>
    %9 = arith.mulf %8, %8 : vector<8x16xf32>
    %cst_3 = arith.constant 0.000000e+00 : f32
    %10 = vector.broadcast %cst_3 : f32 to vector<8x16xf32>
    %11 = arith.subf %10, %9 : vector<8x16xf32>
    %12 = vector.broadcast %5 : f32 to vector<8x16xf32>
    %13 = arith.mulf %11, %12 : vector<8x16xf32>
    %14 = math.exp %13 : vector<8x16xf32>
    %cst_4 = arith.constant -2.000000e+00 : f32
    %15 = vector.broadcast %cst_4 : f32 to vector<8x16xf32>
    %16 = arith.mulf %15, %14 : vector<8x16xf32>
    %cst_5 = arith.constant 2.000000e+00 : f32
    %17 = vector.broadcast %cst_5 : f32 to vector<8x16xf32>
    %18 = arith.mulf %17, %9 : vector<8x16xf32>
    %19 = vector.broadcast %4 : f32 to vector<8x16xf32>
    %20 = arith.subf %19, %18 : vector<8x16xf32>
    %21 = arith.mulf %16, %20 : vector<8x16xf32>
    %22 = vector.broadcast %6 : f32 to vector<8x16xf32>
    %23 = arith.mulf %21, %22 : vector<8x16xf32>
    %24 = arith.addf %2, %23 : vector<8x16xf32>
    %c1 = arith.constant 1 : index
    %25 = memref.load %arg2[%c1] : memref<8xf32, #tpu.memory_space<smem>>
    %c3 = arith.constant 3 : index
    %26 = memref.load %arg2[%c3] : memref<8xf32, #tpu.memory_space<smem>>
    %c5 = arith.constant 5 : index
    %27 = memref.load %arg2[%c5] : memref<8xf32, #tpu.memory_space<smem>>
    %c7 = arith.constant 7 : index
    %28 = memref.load %arg2[%c7] : memref<8xf32, #tpu.memory_space<smem>>
    %29 = vector.broadcast %25 : f32 to vector<8x16xf32>
    %30 = arith.subf %0, %29 : vector<8x16xf32>
    %31 = arith.mulf %30, %30 : vector<8x16xf32>
    %cst_6 = arith.constant 0.000000e+00 : f32
    %32 = vector.broadcast %cst_6 : f32 to vector<8x16xf32>
    %33 = arith.subf %32, %31 : vector<8x16xf32>
    %34 = vector.broadcast %27 : f32 to vector<8x16xf32>
    %35 = arith.mulf %33, %34 : vector<8x16xf32>
    %36 = math.exp %35 : vector<8x16xf32>
    %cst_7 = arith.constant -2.000000e+00 : f32
    %37 = vector.broadcast %cst_7 : f32 to vector<8x16xf32>
    %38 = arith.mulf %37, %36 : vector<8x16xf32>
    %cst_8 = arith.constant 2.000000e+00 : f32
    %39 = vector.broadcast %cst_8 : f32 to vector<8x16xf32>
    %40 = arith.mulf %39, %31 : vector<8x16xf32>
    %41 = vector.broadcast %26 : f32 to vector<8x16xf32>
    %42 = arith.subf %41, %40 : vector<8x16xf32>
    %43 = arith.mulf %38, %42 : vector<8x16xf32>
    %44 = vector.broadcast %28 : f32 to vector<8x16xf32>
    %45 = arith.mulf %43, %44 : vector<8x16xf32>
    %46 = arith.addf %24, %45 : vector<8x16xf32>
    %c0_9 = arith.constant 0 : index
    %c0_10 = arith.constant 0 : index
    %47 = vector.load %arg1[%c0_9, %c0_10] : memref<2x8xf32, #tpu.memory_space<vmem>>, vector<2x8xf32>
    %cst_11 = arith.constant dense<0.000000e+00> : vector<2x16xf32>
    %48 = tpu.matmul %47, %46, %cst_11 {dimension_numbers = #tpu.dot_dimension_numbers<[1], [0], [0], [1], [0, 0, 1, 1], [], []>} : vector<2x8xf32>, vector<8x16xf32>, vector<2x16xf32> -> vector<2x16xf32>
    %49 = vector.broadcast %1 : vector<1x16xf32> to vector<2x16xf32>
    %50 = arith.mulf %48, %49 : vector<2x16xf32>
    %51 = vector.extract_strided_slice %50 {offsets = [0, 0], sizes = [1, 16], strides = [1, 1]} : vector<2x16xf32> to vector<1x16xf32>
    %52 = vector.extract_strided_slice %50 {offsets = [1, 0], sizes = [1, 16], strides = [1, 1]} : vector<2x16xf32> to vector<1x16xf32>
    %53 = vector.extract_strided_slice %52 {offsets = [0, 0], sizes = [1, 1], strides = [1, 1]} : vector<1x16xf32> to vector<1x1xf32>
    %c0_12 = arith.constant 0 : index
    %c0_13 = arith.constant 0 : index
    %54 = vector.load %arg3[%c0_12, %c0_13] : memref<1x16xf32, #tpu.memory_space<vmem>>, vector<1x1xf32>
    tpu.vector_store %arg3[%c0_12, %c0_13], %53 {strides = array<i32>} : memref<1x16xf32, #tpu.memory_space<vmem>>, vector<1x1xf32>,
    %55 = vector.extract_strided_slice %51 {offsets = [0, 0], sizes = [1, 15], strides = [1, 1]} : vector<1x16xf32> to vector<1x15xf32>
    %56 = vector.extract_strided_slice %52 {offsets = [0, 1], sizes = [1, 15], strides = [1, 1]} : vector<1x16xf32> to vector<1x15xf32>
    %57 = arith.addf %55, %56 : vector<1x15xf32>
    %c0_14 = arith.constant 0 : index
    %c1_15 = arith.constant 1 : index
    %58 = vector.load %arg3[%c0_14, %c1_15] : memref<1x16xf32, #tpu.memory_space<vmem>>, vector<1x15xf32>
    tpu.vector_store %arg3[%c0_14, %c1_15], %57 {strides = array<i32>} : memref<1x16xf32, #tpu.memory_space<vmem>>, vector<1x15xf32>,
    return
  }
}

module attributes {stable_mosaic.version = 11 : i64} {
  func.func @_soln_loss_kernel(%arg0: memref<32x1xf32, #tpu.memory_space<vmem>>, %arg1: memref<8x16xf32, #tpu.memory_space<vmem>>, %arg2: memref<8x128xf32, #tpu.memory_space<vmem>>, %arg3: memref<1x128xf32, #tpu.memory_space<vmem>>, %arg4: memref<1x1xf32, #tpu.memory_space<vmem>>) attributes {dimension_semantics = [], scalar_prefetch = 0 : i64, scratch_operands = 0 : i64, tpu.core_type = #tpu.core_type<tc>} {
    %c0 = arith.constant 0 : index
    %c0_0 = arith.constant 0 : index
    %0 = vector.load %arg2[%c0, %c0_0] : memref<8x128xf32, #tpu.memory_space<vmem>>, vector<1x128xf32>
    %c1 = arith.constant 1 : index
    %c0_1 = arith.constant 0 : index
    %1 = vector.load %arg2[%c1, %c0_1] : memref<8x128xf32, #tpu.memory_space<vmem>>, vector<1x128xf32>
    %c2 = arith.constant 2 : index
    %c0_2 = arith.constant 0 : index
    %2 = vector.load %arg2[%c2, %c0_2] : memref<8x128xf32, #tpu.memory_space<vmem>>, vector<1x128xf32>
    %c0_3 = arith.constant 0 : index
    %c0_4 = arith.constant 0 : index
    %3 = vector.load %arg0[%c0_3, %c0_4] : memref<32x1xf32, #tpu.memory_space<vmem>>, vector<16x1xf32>
    %c16 = arith.constant 16 : index
    %c0_5 = arith.constant 0 : index
    %4 = vector.load %arg0[%c16, %c0_5] : memref<32x1xf32, #tpu.memory_space<vmem>>, vector<16x1xf32>
    %5 = vector.broadcast %3 : vector<16x1xf32> to vector<16x128xf32>
    %6 = vector.broadcast %0 : vector<1x128xf32> to vector<16x128xf32>
    %7 = arith.cmpf olt, %5, %6 : vector<16x128xf32>
    %8 = vector.broadcast %0 : vector<1x128xf32> to vector<16x128xf32>
    %9 = vector.broadcast %4 : vector<16x1xf32> to vector<16x128xf32>
    %10 = arith.cmpf ole, %8, %9 : vector<16x128xf32>
    %11 = arith.andi %7, %10 : vector<16x128xi1>
    %12 = arith.extui %11 : vector<16x128xi1> to vector<16x128xi32>
    %13 = arith.sitofp %12 : vector<16x128xi32> to vector<16x128xf32>
    %c0_6 = arith.constant 0 : index
    %c0_7 = arith.constant 0 : index
    %14 = vector.load %arg1[%c0_6, %c0_7] : memref<8x16xf32, #tpu.memory_space<vmem>>, vector<8x16xf32>
    %cst = arith.constant dense<0.000000e+00> : vector<8x128xf32>
    %15 = tpu.matmul %14, %13, %cst {dimension_numbers = #tpu.dot_dimension_numbers<[1], [0], [0], [1], [0, 0, 1, 1], [], []>} : vector<8x16xf32>, vector<16x128xf32>, vector<8x128xf32> -> vector<8x128xf32>
    %16 = vector.extract_strided_slice %15 {offsets = [0, 0], sizes = [1, 128], strides = [1, 1]} : vector<8x128xf32> to vector<1x128xf32>
    %17 = vector.extract_strided_slice %15 {offsets = [1, 0], sizes = [1, 128], strides = [1, 1]} : vector<8x128xf32> to vector<1x128xf32>
    %18 = arith.mulf %17, %0 : vector<1x128xf32>
    %19 = arith.addf %16, %18 : vector<1x128xf32>
    %c0_8 = arith.constant 0 : index
    %c0_9 = arith.constant 0 : index
    %20 = vector.load %arg3[%c0_8, %c0_9] : memref<1x128xf32, #tpu.memory_space<vmem>>, vector<1x128xf32>
    tpu.vector_store %arg3[%c0_8, %c0_9], %19 {strides = array<i32>} : memref<1x128xf32, #tpu.memory_space<vmem>>, vector<1x128xf32>,
    %21 = arith.subf %19, %2 : vector<1x128xf32>
    %22 = arith.mulf %21, %21 : vector<1x128xf32>
    %23 = arith.mulf %22, %1 : vector<1x128xf32>
    %24 = vector.shape_cast %23 : vector<1x128xf32> to vector<1x1x128xf32>
    %cst_10 = arith.constant dense<0.000000e+00> : vector<1xf32>
    %25 = vector.multi_reduction <add>, %24, %cst_10 [1, 2] : vector<1x1x128xf32> to vector<1xf32>
    %26 = vector.shape_cast %25 : vector<1xf32> to vector<1x1x1xf32>
    %27 = vector.extract %26[0, 0, 0] : f32 from vector<1x1x1xf32>
    %28 = vector.broadcast %27 : f32 to vector<1x1xf32>
    %c0_11 = arith.constant 0 : index
    %c0_12 = arith.constant 0 : index
    %29 = vector.load %arg4[%c0_11, %c0_12] : memref<1x1xf32, #tpu.memory_space<vmem>>, vector<1x1xf32>
    tpu.vector_store %arg4[%c0_11, %c0_12], %28 {strides = array<i32>} : memref<1x1xf32, #tpu.memory_space<vmem>>, vector<1x1xf32>,
    return
  }
}

</mosaic_0001>

<llo_original>
// kernel: custom-call.84
$region0: #{custom-call.84}
  %s0 = inlined_call_operand.vmem [shape: f32[3,128], index: 0, kind: output, shape index: {}]

// kernel: custom-call.83
$region0: #{custom-call.83}
  %s0 = inlined_call_operand.vmem [shape: f32[3,14,1], index: 0, kind: output, shape index: {}]

// kernel: reverse.13
$region0: #{reverse.13}
  %s0 = inlined_call_operand.vmem [shape: f32[8], index: 0, kind: input, shape index: {}]
  %s1 = inlined_call_operand.vmem [shape: f32[8], index: 1, kind: output, shape index: {}]
  %v2 = vlaneseq
  %v3 = vsub.s32 7, %v2
  %4 = vset.pattern.permute.xlu0 %v3
  $region1: #{reverse.13} parent=0
    #allocation0 [shape = 'u8[8192]{0}', space=vmem, size = 0x2000, scoped, tag = 'operand span for operand 0']
    #allocation1 [shape = 'u8[1024]{0}', space=vmem, size = 0x400, scoped, tag = 'packed  for operand 0']
    #allocation2 [shape = 'u8[4096]{0}', space=vmem, size = 0x1000, scoped, tag = 'operand span for operand 1']
    #allocation3 [shape = 'u8[512]{0}', space=vmem, size = 0x400, scoped, tag = 'packed  for operand 1']
    %s5 = scalar_lea.vmem [#allocation1], 1
    // Predicated region
    $region2: #{reverse.13} parent=1 // pred_check
      _
    $region3: #{reverse.13} parent=1 // pred_check_branch
      %7 = sbr.rel (0) target = $region5
    $region4: #{reverse.13} parent=1 // pred_region
      // Predicated region
      $region6: #{reverse.13} parent=4 // pred_check
        _
      $region7: #{reverse.13} parent=4 // pred_check_branch
        %9 = sbr.rel target = $region9
      $region8: #{reverse.13} parent=4 // pred_region
        // Predicated region
        $region21: #{reverse.13} parent=8 // pred_check
          _
        $region22: #{reverse.13} parent=8 // pred_check_branch
          %24 = sbr.rel (0) target = $region24
        $region23: #{reverse.13} parent=8 // pred_region
          loop: start=0, step=1, limit=1
          $region25: #{reverse.13} parent=23 // loop_pre_header
            _
          $region26: #{reverse.13} parent=23 // loop_header
            %s27 = sphi 0, %s31
            %p28 = scmp.ge.s32.totalorder %s27, 1
            %s32 = sphi %s0, %s0
            %s33 = sphi %s5, %s5
          $region27: #{reverse.13} parent=23 // loop_header_branch
            %30 = sbr.rel (%p28) target = $region31
          $region28: #{reverse.13} parent=23 // loop_body
            %v34 = vld [vmem:[%s32] sm:$0x1]
            %35 = vst [vmem:[%s33] sm:$0x1] %v34
          $region29: #{reverse.13} parent=23 // loop_footer
            %s31 = sadd.s32 1, %s27
          $region30: #{reverse.13} parent=23 // loop_footer_branch
            %26 = sbr.rel target = $region26
          $region31: #{reverse.13} parent=23 // loop_exit
            _
        $region24: #{reverse.13} parent=8 // pred_fallthru
          _
      $region9: #{reverse.13} parent=4 // pred_fallthru
        _
      // Predicated region
      $region10: #{reverse.13} parent=4 // pred_check
        _
      $region11: #{reverse.13} parent=4 // pred_check_branch
        %11 = sbr.rel (0) target = $region13
      $region12: #{reverse.13} parent=4 // pred_region
        loop: start=0, step=1, limit=1
        $region14: #{reverse.13} parent=12 // loop_pre_header
          _
        $region15: #{reverse.13} parent=12 // loop_header
          %s14 = sphi 0, %s18
          %p15 = scmp.ge.s32.totalorder %s14, 1
          %s19 = sphi %s0, %s0
          %s20 = sphi %s5, %s5
        $region16: #{reverse.13} parent=12 // loop_header_branch
          %17 = sbr.rel (%p15) target = $region20
        $region17: #{reverse.13} parent=12 // loop_body
          %v21 = vld [vmem:[%s19] sm:$0x1]
          %22 = vst [vmem:[%s20] sm:$0x1] %v21
        $region18: #{reverse.13} parent=12 // loop_footer
          %s18 = sadd.s32 1, %s14
        $region19: #{reverse.13} parent=12 // loop_footer_branch
          %13 = sbr.rel target = $region15
        $region20: #{reverse.13} parent=12 // loop_exit
          _
      $region13: #{reverse.13} parent=4 // pred_fallthru
        _
    $region5: #{reverse.13} parent=1 // pred_fallthru
      _
    %36 = vnop
    %s38 = sshllo.u32 0, 1
    %s39 = scalar_lea.vmem [#allocation1], 1
    %v40 = vld [vmem:[%s39] sm:%s38]
    %s41 = scalar_lea.vmem [#allocation0], 8
    %42 = vst [vmem:[%s41] sm:%s38] %v40
    %v43 = vld [vmem:[#allocation1] sm:%s38]
    %44 = vst [vmem:[#allocation0] sm:%s38] %v43
    %s45 = scalar_lea.vmem [#allocation0], 7
    %v46 = vld [vmem:[%s45] ss:$-1 sm:$0xff]
    %v47 = vrot.slane %v46, 7
    %48 = vperm.xlu0 %4, %v47
    %v49 = vpop.permute.xlu0 %48
    %50 = vst [vmem:[#allocation2] sm:$0xff] %v49
    %s51 = scalar_lea.vmem [#allocation0], 8
    %s52 = scalar_lea.vmem %s51, 7 [#allocation0]
    %v53 = vld [vmem:[%s52] ss:$-1 sm:$0xff]
    %v54 = vrot.slane %v53, 7
    %55 = vperm.xlu0 %4, %v54
    %v56 = vpop.permute.xlu0 %55
    %v57 = vlaneseq
    %v58 = vshrl.u32 %v57, 7
    %vm59 = vcmp.lt.s32.totalorder %v58, 1
    %60 = vst.msk [vmem:[#allocation2] sm:$0xff] %vm59, %v56
    %s62 = sshllo.u32 0, 1
    %v64 = vld [vmem:[#allocation2] sm:%s62]
    %s65 = sshllo.u32 0, 1
    %66 = vst [vmem:[#allocation3] sm:%s65] %v64
    // Predicated region
    $region32: #{reverse.13} parent=1 // pred_check
      _
    $region33: #{reverse.13} parent=1 // pred_check_branch
      %68 = sbr.rel (0) target = $region35
    $region34: #{reverse.13} parent=1 // pred_region
      // Predicated region
      $region36: #{reverse.13} parent=34 // pred_check
        _
      $region37: #{reverse.13} parent=34 // pred_check_branch
        %70 = sbr.rel target = $region39
      $region38: #{reverse.13} parent=34 // pred_region
        // Predicated region
        $region51: #{reverse.13} parent=38 // pred_check
          _
        $region52: #{reverse.13} parent=38 // pred_check_branch
          %85 = sbr.rel (0) target = $region54
        $region53: #{reverse.13} parent=38 // pred_region
          loop: start=0, step=1, limit=1
          $region55: #{reverse.13} parent=53 // loop_pre_header
            _
          $region56: #{reverse.13} parent=53 // loop_header
            %s88 = sphi 0, %s92
            %p89 = scmp.ge.s32.totalorder %s88, 1
            %s93 = sphi [#allocation3], [#allocation3]
            %s94 = sphi %s1, %s1
          $region57: #{reverse.13} parent=53 // loop_header_branch
            %91 = sbr.rel (%p89) target = $region61
          $region58: #{reverse.13} parent=53 // loop_body
            %v95 = vld [vmem:[%s93] sm:$0x1]
            %96 = vst [vmem:[%s94] sm:$0x1] %v95
          $region59: #{reverse.13} parent=53 // loop_footer
            %s92 = sadd.s32 1, %s88
          $region60: #{reverse.13} parent=53 // loop_footer_branch
            %87 = sbr.rel target = $region56
          $region61: #{reverse.13} parent=53 // loop_exit
            _
        $region54: #{reverse.13} parent=38 // pred_fallthru
          _
      $region39: #{reverse.13} parent=34 // pred_fallthru
        _
      // Predicated region
      $region40: #{reverse.13} parent=34 // pred_check
        _
      $region41: #{reverse.13} parent=34 // pred_check_branch
        %72 = sbr.rel (0) target = $region43
      $region42: #{reverse.13} parent=34 // pred_region
        loop: start=0, step=1, limit=1
        $region44: #{reverse.13} parent=42 // loop_pre_header
          _
        $region45: #{reverse.13} parent=42 // loop_header
          %s75 = sphi 0, %s79
          %p76 = scmp.ge.s32.totalorder %s75, 1
          %s80 = sphi [#allocation3], [#allocation3]
          %s81 = sphi %s1, %s1
        $region46: #{reverse.13} parent=42 // loop_header_branch
          %78 = sbr.rel (%p76) target = $region50
        $region47: #{reverse.13} parent=42 // loop_body
          %v82 = vld [vmem:[%s80] sm:$0x1]
          %83 = vst [vmem:[%s81] sm:$0x1] %v82
        $region48: #{reverse.13} parent=42 // loop_footer
          %s79 = sadd.s32 1, %s75
        $region49: #{reverse.13} parent=42 // loop_footer_branch
          %74 = sbr.rel target = $region45
        $region50: #{reverse.13} parent=42 // loop_exit
          _
      $region43: #{reverse.13} parent=34 // pred_fallthru
        _
    $region35: #{reverse.13} parent=1 // pred_fallthru
      _
    %97 = vnop

// kernel: custom-call.114
$region0: #{custom-call.114}
  %s0 = inlined_call_operand.vmem [shape: f32[14,14], index: 0, kind: input, shape index: {}]
  %s1 = inlined_call_operand.vmem [shape: f32[14,14], index: 1, kind: output, shape index: {0}]
  %s2 = inlined_call_operand.hbm [shape: s32[14], index: 2, kind: output, shape index: {1}]
  %s3 = inlined_call_operand.vmem [shape: s32[14], index: 3, kind: output, shape index: {2}]
  %4 = xla_tuple %s1, %s2, %s3
  $region1: #{custom-call.114} parent=0
    #allocation0 [shape = 'u8[8192]{0}', space=vmem, size = 0x2000, scoped, tag = 'operand span for operand 0']
    #allocation1 [shape = 'u8[8192]{0}', space=vmem, size = 0x2000, scoped, tag = 'operand span for operand 1']
    #allocation2 [shape = 'u8[4096]{0}', space=vmem, size = 0x1000, scoped, tag = 'operand span for operand 2']
    #allocation3 [shape = 'u8[512]{0}', space=vmem, size = 0x400, scoped, tag = 'packed  for operand 2']
    #allocation4 [shape = 's32[1]{0}', space=sflag, size = 0x4, scoped, tag = 'scoped memory for custom-call.114']
    #allocation5 [shape = 'u8[4096]{0}', space=vmem, size = 0x1000, scoped, tag = 'operand span for operand 3']
    #allocation6 [shape = 'u8[512]{0}', space=vmem, size = 0x400, scoped, tag = 'packed  for operand 3']
    #allocation7 [shape = 's32[14,128]{1,0}', space=vmem, size = 0x2000, scoped, tag = 'scratch for permutations']
    %5 = vsyncpa [#allocation4], 0
    %p7 = scmp.gt.s32.totalorder 16, 0
    // Predicated region
    $region2: #{custom-call.114} parent=1 // pred_check
      %p8 = pneg %p7
    $region3: #{custom-call.114} parent=1 // pred_check_branch
      %10 = sbr.rel (%p8) target = $region5
    $region4: #{custom-call.114} parent=1 // pred_region
      %s11 = sshra.s32 16, 3
      %p12 = scmp.gt.s32.totalorder %s11, 0
      // Predicated region
      $region6: #{custom-call.114} parent=4 // pred_check
        %p13 = pneg %p12
      $region7: #{custom-call.114} parent=4 // pred_check_branch
        %15 = sbr.rel (%p13) target = $region9
      $region8: #{custom-call.114} parent=4 // pred_region
        %s16 = ssub.s32 %s11, 1
        %s17 = smul.u32 %s16, 128
        %s18 = sshra.s32 %s17, 4
        %s19 = scalar_lea.vmem %s0, %s18
        %v20 = vld [vmem:[%s0] sm:$0xff]
        // While loop
        $region10: #{custom-call.114} parent=8 // loop_pre_header
          _
        $region11: #{custom-call.114} parent=8 // loop_header
          %s21 = sphi %s0, %s43
          %s22 = sphi [#allocation0], %s44
          %v23 = vphi %v20, %v45
          %s24 = ssub.s32 %s19, 64
          %p25 = scmp.gt.s32.totalorder %s21, %s24
        $region12: #{custom-call.114} parent=8 // loop_header_branch
          %27 = sbr.rel (%p25) target = $region16
        $region13: #{custom-call.114} parent=8 // loop_body
          %28 = vst [vmem:[%s22] sm:$0xff] %v23
          %v29 = vld [vmem:[%s21 + $0x8] sm:$0xff]
          %30 = vst [vmem:[%s22 + $0x8] sm:$0xff] %v29
          %v31 = vld [vmem:[%s21 + $0x10] sm:$0xff]
          %32 = vst [vmem:[%s22 + $0x10] sm:$0xff] %v31
          %v33 = vld [vmem:[%s21 + $0x18] sm:$0xff]
          %34 = vst [vmem:[%s22 + $0x18] sm:$0xff] %v33
          %v35 = vld [vmem:[%s21 + $0x20] sm:$0xff]
          %36 = vst [vmem:[%s22 + $0x20] sm:$0xff] %v35
          %v37 = vld [vmem:[%s21 + $0x28] sm:$0xff]
          %38 = vst [vmem:[%s22 + $0x28] sm:$0xff] %v37
          %v39 = vld [vmem:[%s21 + $0x30] sm:$0xff]
          %40 = vst [vmem:[%s22 + $0x30] sm:$0xff] %v39
          %v41 = vld [vmem:[%s21 + $0x38] sm:$0xff]
          %42 = vst [vmem:[%s22 + $0x38] sm:$0xff] %v41
        $region14: #{custom-call.114} parent=8 // loop_footer
          %s43 = scalar_lea.vmem %s21, 64
          %s44 = scalar_lea.vmem %s22, 64
          %v45 = vld [vmem:[%s21 + $0x40] sm:$0xff]
        $region15: #{custom-call.114} parent=8 // loop_footer_branch
          %46 = sbr.rel target = $region11
        $region16: #{custom-call.114} parent=8 // loop_exit
          _
        // While loop
        $region17: #{custom-call.114} parent=8 // loop_pre_header
          _
        $region18: #{custom-call.114} parent=8 // loop_header
          %s47 = sphi %s21, %s55
          %s48 = sphi %s22, %s56
          %v49 = vphi %v23, %v49
          %p50 = scmp.gt.s32.totalorder %s47, %s19
        $region19: #{custom-call.114} parent=8 // loop_header_branch
          %52 = sbr.rel (%p50) target = $region23
        $region20: #{custom-call.114} parent=8 // loop_body
          %v53 = vld [vmem:[%s47] sm:$0xff]
          %54 = vst [vmem:[%s48] sm:$0xff] %v53
        $region21: #{custom-call.114} parent=8 // loop_footer
          %s55 = scalar_lea.vmem %s47, 8
          %s56 = scalar_lea.vmem %s48, 8
        $region22: #{custom-call.114} parent=8 // loop_footer_branch
          %57 = sbr.rel target = $region18
        $region23: #{custom-call.114} parent=8 // loop_exit
          _
      $region9: #{custom-call.114} parent=4 // pred_fallthru
        _
      %s58 = sand.u32 16, 7
      %s59 = sshllo.u32 0, %s58
      %s60 = smul.u32 %s11, 128
      %s61 = sshra.s32 %s60, 4
      %s62 = scalar_lea.vmem [#allocation0], %s61
      %s63 = smul.u32 %s11, 128
      %s64 = sshra.s32 %s63, 4
      %s65 = scalar_lea.vmem %s0, %s64
      %v66 = vld [vmem:[%s65] sm:%s59]
      %67 = vst [vmem:[%s62] sm:%s59] %v66
    $region5: #{custom-call.114} parent=1 // pred_fallthru
      _
    %v68 = vld [vmem:[#allocation0] sm:$0xff]
    %69 = vst [vmem:[#allocation1] sm:$0xff] %v68
    %s70 = scalar_lea.vmem [#allocation1], 8
    %s71 = scalar_lea.vmem [#allocation0], 8
    %v72 = vld [vmem:[%s71] sm:$0xff]
    %73 = vst [vmem:[%s70] sm:$0xff] %v72
    %74 = vst [vmem:[#allocation2] sm:$0x1] 0
    %v75 = vlaneseq
    %v76 = vshrl.u32 %v75, 7
    %v77 = vmov %v76
    loop: start=0, step=1, limit=2
    $region24: #{custom-call.114} parent=1 // loop_pre_header
      _
    $region25: #{custom-call.114} parent=1 // loop_header
      %s79 = sphi 0, %s83
      %p80 = scmp.ge.s32.totalorder %s79, 2
    $region26: #{custom-call.114} parent=1 // loop_header_branch
      %82 = sbr.rel (%p80) target = $region30
    $region27: #{custom-call.114} parent=1 // loop_body
      %s84 = smul.addr %s79, 8
      %s85 = scalar_lea.vmem [#allocation7], %s84
      %s86 = smul.u32 %s79, 8
      %v87 = vstv %s86
      %v88 = vadd.s32 %v77, %v87
      %89 = vst [vmem:[%s85] sm:$0xff] %v88
    $region28: #{custom-call.114} parent=1 // loop_footer
      %s83 = sadd.s32 1, %s79
    $region29: #{custom-call.114} parent=1 // loop_footer_branch
      %78 = sbr.rel target = $region25
    $region30: #{custom-call.114} parent=1 // loop_exit
      _
    loop: start=0, step=1, limit=14
    $region31: #{custom-call.114} parent=1 // loop_pre_header
      _
    $region32: #{custom-call.114} parent=1 // loop_header
      %s91 = sphi 0, %s95
      %p92 = scmp.ge.s32.totalorder %s91, 14
    $region33: #{custom-call.114} parent=1 // loop_header_branch
      %94 = sbr.rel (%p92) target = $region37
    $region34: #{custom-call.114} parent=1 // loop_body
      %v96 = vstv %s91
      %v97 = vlaneseq
      %v98 = vshrl.u32 %v97, 7
      %v99 = vmov %v98
      %v100 = vld [vmem:[#allocation1] sm:$0xff]
      %v101 = vand.u32 2147483647, %v100
      %v103 = vstv %s91
      %vm104 = vcmp.ge.s32.totalorder %v99, %v103
      %vm105 = vcmp.lt.s32.totalorder %v99, 14
      %vm106 = vmand %vm104, %vm105
      %vm107 = vcmp.lt.f32.partialorder -inf, %v101
      %vm108 = vmand %vm106, %vm107
      %v109 = vsel %vm108, %v99, %v96
      %v110 = vsel %vm108, %v101, -inf
      %s111 = scalar_lea.vmem [#allocation1], 8
      %v112 = vld [vmem:[%s111] sm:$0xff]
      %v113 = vand.u32 2147483647, %v112
      %v114 = vadd.s32 %v99, 8
      %v115 = vstv %s91
      %vm116 = vcmp.ge.s32.totalorder %v114, %v115
      %vm117 = vcmp.lt.s32.totalorder %v114, 14
      %vm118 = vmand %vm116, %vm117
      %vm119 = vcmp.lt.f32.partialorder %v110, %v113
      %vm120 = vmand %vm118, %vm119
      %v121 = vsel %vm120, %v114, %v109
      %v122 = vsel %vm120, %v113, %v110
      %v123 = vrot.slane %v122, 1
      %v124 = vrot.slane %v121, 1
      %vm125 = vcmp.ge.f32.partialorder %v123, %v122
      %v126 = vsel %vm125, %v123, %v122
      %v127 = vsel %vm125, %v124, %v121
      %v128 = vrot.slane %v123, 1
      %v129 = vrot.slane %v124, 1
      %vm130 = vcmp.ge.f32.partialorder %v128, %v126
      %v131 = vsel %vm130, %v128, %v126
      %v132 = vsel %vm130, %v129, %v127
      %v133 = vrot.slane %v128, 1
      %v134 = vrot.slane %v129, 1
      %vm135 = vcmp.ge.f32.partialorder %v133, %v131
      %v136 = vsel %vm135, %v133, %v131
      %v137 = vsel %vm135, %v134, %v132
      %v138 = vrot.slane %v133, 1
      %v139 = vrot.slane %v134, 1
      %vm140 = vcmp.ge.f32.partialorder %v138, %v136
      %v141 = vsel %vm140, %v138, %v136
      %v142 = vsel %vm140, %v139, %v137
      %v143 = vrot.slane %v138, 1
      %v144 = vrot.slane %v139, 1
      %vm145 = vcmp.ge.f32.partialorder %v143, %v141
      %v146 = vsel %vm145, %v143, %v141
      %v147 = vsel %vm145, %v144, %v142
      %v148 = vrot.slane %v143, 1
      %v149 = vrot.slane %v144, 1
      %vm150 = vcmp.ge.f32.partialorder %v148, %v146
      %v151 = vsel %vm150, %v148, %v146
      %v152 = vsel %vm150, %v149, %v147
      %v153 = vrot.slane %v148, 1
      %v154 = vrot.slane %v149, 1
      %vm155 = vcmp.ge.f32.partialorder %v153, %v151
      %v156 = vsel %vm155, %v153, %v151
      %v157 = vsel %vm155, %v154, %v152
      %s158 = ssub.s32 128, %s91
      %159 = vrot.lane.b32.xlu0 %v157, %s158
      %v160 = vpop.permute.xlu0 %159
      %s161 = vtos %v160
      %v162 = vstv %s91
      %v163 = vlaneseq
      %v164 = vand.u32 %v163, 127
      %vm165 = vcmp.eq.s32.totalorder %v164, %v162
      %v166 = vstv %s161
      %v167 = vld [vmem:[#allocation2] ss:$0 sm:$0xff]
      %v168 = vsel %vm165, %v166, %v167
      %169 = vst [vmem:[#allocation2] sm:$0x1] %v168
      %s170 = scalar_lea.vmem [#allocation1], %s91
      %s171 = scalar_lea.vmem [#allocation1], %s161
      %v172 = vld [vmem:[%s170] ss:$0 sm:$0xff]
      %v173 = vld [vmem:[%s171] ss:$0 sm:$0xff]
      %174 = vst [vmem:[%s171] sm:$0x1] %v172
      %175 = vst [vmem:[%s170] sm:$0x1] %v173
      %s176 = scalar_lea.vmem [#allocation7], %s91
      %s177 = scalar_lea.vmem [#allocation7], %s161
      %v178 = vld [vmem:[%s176] ss:$0 sm:$0xff]
      %v179 = vld [vmem:[%s177] ss:$0 sm:$0xff]
      %180 = vst [vmem:[%s177] sm:$0x1] %v178
      %181 = vst [vmem:[%s176] sm:$0x1] %v179
      %vm182 = vcmp.ne.f32.partialorder %v173, 0.0
      %vm183 = vmand %vm165, %vm182
      %v184 = vsel %vm183, %v173, 1.0
      %v185 = vlaneseq
      %v186 = vand.u32 %v185, 127
      %v187 = vstv %s91
      %vm188 = vcmp.gt.s32.totalorder %v186, %v187
      %v189 = vsel %vm188, %v173, 0.0
      %v190 = vlaneseq
      %v191 = vshrl.u32 %v190, 7
      %v192 = vmov %v191
      %v193 = vld [vmem:[#allocation1] sm:$0xff]
      %v195 = vstv %s91
      %vm196 = vcmp.gt.s32.totalorder %v192, %v195
      %v197 = vsel %vm196, %v184, 1.0
      %v198 = vrcp.pop %v197
      %v199 = vmul.f32 %v193, %v198
      %vm200 = vmand %vm196, %vm165
      %v201 = vsel %vm200, %v199, 0.0
      %202 = vadd.xlane.f32.xlu0 %v201
      %v203 = vpop.xlane.xlu0 %202
      %v204 = vmul.f32 %v203, %v189
      %v205 = vsub.f32 %v199, %v204
      %206 = vst [vmem:[#allocation1] sm:$0xff] %v205
      %s207 = scalar_lea.vmem [#allocation1], 8
      %v208 = vld [vmem:[%s207] sm:$0xff]
      %v209 = vadd.s32 %v192, 8
      %v210 = vstv %s91
      %vm211 = vcmp.gt.s32.totalorder %v209, %v210
      %v212 = vsel %vm211, %v184, 1.0
      %v213 = vrcp.pop %v212
      %v214 = vmul.f32 %v208, %v213
      %vm215 = vmand %vm211, %vm165
      %v216 = vsel %vm215, %v214, 0.0
      %217 = vadd.xlane.f32.xlu0 %v216
      %v218 = vpop.xlane.xlu0 %217
      %v219 = vmul.f32 %v218, %v189
      %v220 = vsub.f32 %v214, %v219
      %221 = vst [vmem:[%s207] sm:$0xff] %v220
    $region35: #{custom-call.114} parent=1 // loop_footer
      %s95 = sadd.s32 1, %s91
    $region36: #{custom-call.114} parent=1 // loop_footer_branch
      %90 = sbr.rel target = $region32
    $region37: #{custom-call.114} parent=1 // loop_exit
      _
    %v222 = vld [vmem:[#allocation7] sm:$0xff]
    %s223 = scalar_lea.vmem [#allocation7], 8
    %v224 = vld [vmem:[%s223] sm:$0xff]
    %s225 = scalar_lea.vmem [#allocation7], 16
    %s226 = scalar_lea.vmem [#allocation7], 24
    %s227 = scalar_lea.vmem [#allocation7], 32
    %s228 = scalar_lea.vmem [#allocation7], 40
    %s229 = scalar_lea.vmem [#allocation7], 48
    %s230 = scalar_lea.vmem [#allocation7], 56
    %s231 = scalar_lea.vmem [#allocation7], 64
    %s232 = scalar_lea.vmem [#allocation7], 72
    %s233 = scalar_lea.vmem [#allocation7], 80
    %s234 = scalar_lea.vmem [#allocation7], 88
    %s235 = scalar_lea.vmem [#allocation7], 96
    %s236 = scalar_lea.vmem [#allocation7], 104
    %s237 = scalar_lea.vmem [#allocation7], 112
    %s238 = scalar_lea.vmem [#allocation7], 120
    %239 = vxpose.xlu0.b32.start [1/16] %v222, 128
    %240 = vxpose.xlu0.b32.cont [2/16] %v224, 128
    %241 = vxpose.xlu0.b32.cont [3/16] 0, 128
    %242 = vxpose.xlu0.b32.cont [4/16] 0, 128
    %243 = vxpose.xlu0.b32.cont [5/16] 0, 128
    %244 = vxpose.xlu0.b32.cont [6/16] 0, 128
    %245 = vxpose.xlu0.b32.cont [7/16] 0, 128
    %246 = vxpose.xlu0.b32.cont [8/16] 0, 128
    %247 = vxpose.xlu0.b32.cont [9/16] 0, 128
    %248 = vxpose.xlu0.b32.cont [10/16] 0, 128
    %249 = vxpose.xlu0.b32.cont [11/16] 0, 128
    %250 = vxpose.xlu0.b32.cont [12/16] 0, 128
    %251 = vxpose.xlu0.b32.cont [13/16] 0, 128
    %252 = vxpose.xlu0.b32.cont [14/16] 0, 128
    %253 = vxpose.xlu0.b32.cont [15/16] 0, 128
    %254 = vxpose.xlu0.b32.end [16/16] 0, 128
    %v255 = vpop.trf.xlu0
    %v256 = vpop.trf.xlu0
    %v257 = vpop.trf.xlu0
    %v258 = vpop.trf.xlu0
    %v259 = vpop.trf.xlu0
    %v260 = vpop.trf.xlu0
    %v261 = vpop.trf.xlu0
    %v262 = vpop.trf.xlu0
    %v263 = vpop.trf.xlu0
    %v264 = vpop.trf.xlu0
    %v265 = vpop.trf.xlu0
    %v266 = vpop.trf.xlu0
    %v267 = vpop.trf.xlu0
    %v268 = vpop.trf.xlu0
    %v269 = vpop.trf.xlu0
    %v270 = vpop.trf.xlu0
    %271 = vst [vmem:[#allocation5] sm:$0x1] %v255
    %s273 = sshllo.u32 0, 1
    %v275 = vld [vmem:[#allocation2] sm:%s273]
    %s276 = sshllo.u32 0, 1
    %277 = vst [vmem:[#allocation3] sm:%s276] %v275
    %s279 = sshllo.u32 0, 1
    %v281 = vld [vmem:[#allocation5] sm:%s279]
    %s282 = sshllo.u32 0, 1
    %283 = vst [vmem:[#allocation6] sm:%s282] %v281
    %p285 = scmp.gt.s32.totalorder 16, 0
    // Predicated region
    $region38: #{custom-call.114} parent=1 // pred_check
      %p286 = pneg %p285
    $region39: #{custom-call.114} parent=1 // pred_check_branch
      %288 = sbr.rel (%p286) target = $region41
    $region40: #{custom-call.114} parent=1 // pred_region
      %s289 = sshra.s32 16, 3
      %p290 = scmp.gt.s32.totalorder %s289, 0
      // Predicated region
      $region42: #{custom-call.114} parent=40 // pred_check
        %p291 = pneg %p290
      $region43: #{custom-call.114} parent=40 // pred_check_branch
        %293 = sbr.rel (%p291) target = $region45
      $region44: #{custom-call.114} parent=40 // pred_region
        %s294 = ssub.s32 %s289, 1
        %s295 = smul.u32 %s294, 128
        %s296 = sshra.s32 %s295, 4
        %s297 = scalar_lea.vmem [#allocation1], %s296
        %v298 = vld [vmem:[#allocation1] sm:$0xff]
        // While loop
        $region46: #{custom-call.114} parent=44 // loop_pre_header
          _
        $region47: #{custom-call.114} parent=44 // loop_header
          %s299 = sphi [#allocation1], %s321
          %s300 = sphi %s1, %s322
          %v301 = vphi %v298, %v323
          %s302 = ssub.s32 %s297, 64
          %p303 = scmp.gt.s32.totalorder %s299, %s302
        $region48: #{custom-call.114} parent=44 // loop_header_branch
          %305 = sbr.rel (%p303) target = $region52
        $region49: #{custom-call.114} parent=44 // loop_body
          %306 = vst [vmem:[%s300] sm:$0xff] %v301
          %v307 = vld [vmem:[%s299 + $0x8] sm:$0xff]
          %308 = vst [vmem:[%s300 + $0x8] sm:$0xff] %v307
          %v309 = vld [vmem:[%s299 + $0x10] sm:$0xff]
          %310 = vst [vmem:[%s300 + $0x10] sm:$0xff] %v309
          %v311 = vld [vmem:[%s299 + $0x18] sm:$0xff]
          %312 = vst [vmem:[%s300 + $0x18] sm:$0xff] %v311
          %v313 = vld [vmem:[%s299 + $0x20] sm:$0xff]
          %314 = vst [vmem:[%s300 + $0x20] sm:$0xff] %v313
          %v315 = vld [vmem:[%s299 + $0x28] sm:$0xff]
          %316 = vst [vmem:[%s300 + $0x28] sm:$0xff] %v315
          %v317 = vld [vmem:[%s299 + $0x30] sm:$0xff]
          %318 = vst [vmem:[%s300 + $0x30] sm:$0xff] %v317
          %v319 = vld [vmem:[%s299 + $0x38] sm:$0xff]
          %320 = vst [vmem:[%s300 + $0x38] sm:$0xff] %v319
        $region50: #{custom-call.114} parent=44 // loop_footer
          %s321 = scalar_lea.vmem %s299, 64
          %s322 = scalar_lea.vmem %s300, 64
          %v323 = vld [vmem:[%s299 + $0x40] sm:$0xff]
        $region51: #{custom-call.114} parent=44 // loop_footer_branch
          %324 = sbr.rel target = $region47
        $region52: #{custom-call.114} parent=44 // loop_exit
          _
        // While loop
        $region53: #{custom-call.114} parent=44 // loop_pre_header
          _
        $region54: #{custom-call.114} parent=44 // loop_header
          %s325 = sphi %s299, %s333
          %s326 = sphi %s300, %s334
          %v327 = vphi %v301, %v327
          %p328 = scmp.gt.s32.totalorder %s325, %s297
        $region55: #{custom-call.114} parent=44 // loop_header_branch
          %330 = sbr.rel (%p328) target = $region59
        $region56: #{custom-call.114} parent=44 // loop_body
          %v331 = vld [vmem:[%s325] sm:$0xff]
          %332 = vst [vmem:[%s326] sm:$0xff] %v331
        $region57: #{custom-call.114} parent=44 // loop_footer
          %s333 = scalar_lea.vmem %s325, 8
          %s334 = scalar_lea.vmem %s326, 8
        $region58: #{custom-call.114} parent=44 // loop_footer_branch
          %335 = sbr.rel target = $region54
        $region59: #{custom-call.114} parent=44 // loop_exit
          _
      $region45: #{custom-call.114} parent=40 // pred_fallthru
        _
      %s336 = sand.u32 16, 7
      %s337 = sshllo.u32 0, %s336
      %s338 = smul.u32 %s289, 128
      %s339 = sshra.s32 %s338, 4
      %s340 = scalar_lea.vmem %s1, %s339
      %s341 = smul.u32 %s289, 128
      %s342 = sshra.s32 %s341, 4
      %s343 = scalar_lea.vmem [#allocation1], %s342
      %v344 = vld [vmem:[%s343] sm:%s337]
      %345 = vst [vmem:[%s340] sm:%s337] %v344
    $region41: #{custom-call.114} parent=1 // pred_fallthru
      _
    // Predicated region
    $region60: #{custom-call.114} parent=1 // pred_check
      _
    $region61: #{custom-call.114} parent=1 // pred_check_branch
      %347 = sbr.rel (0) target = $region63
    $region62: #{custom-call.114} parent=1 // pred_region
      %s349 = ssub.s32 16, 16
      %350 = vsyncadd [#allocation4], %s349
      %s351 = sshll.u32 [#allocation3], 4
      %s352 = int_to_ptr.vmem [resolvable:$true] %s351
      %354 = dma.vmem_to_hbm [thread:$0]  %s352, 16, %s2, [#allocation4]
    $region63: #{custom-call.114} parent=1 // pred_fallthru
      _
    // Predicated region
    $region64: #{custom-call.114} parent=1 // pred_check
      _
    $region65: #{custom-call.114} parent=1 // pred_check_branch
      %356 = sbr.rel (0) target = $region67
    $region66: #{custom-call.114} parent=1 // pred_region
      %p358 = scmp.gt.s32.totalorder 1, 0
      // Predicated region
      $region68: #{custom-call.114} parent=66 // pred_check
        %p359 = pneg %p358
      $region69: #{custom-call.114} parent=66 // pred_check_branch
        %361 = sbr.rel (%p359) target = $region71
      $region70: #{custom-call.114} parent=66 // pred_region
        %s362 = sshra.s32 1, 3
        %p363 = scmp.gt.s32.totalorder %s362, 0
        // Predicated region
        $region72: #{custom-call.114} parent=70 // pred_check
          %p364 = pneg %p363
        $region73: #{custom-call.114} parent=70 // pred_check_branch
          %366 = sbr.rel (%p364) target = $region75
        $region74: #{custom-call.114} parent=70 // pred_region
          %s367 = ssub.s32 %s362, 1
          %s368 = smul.u32 %s367, 128
          %s369 = sshra.s32 %s368, 4
          %s370 = scalar_lea.vmem [#allocation6], %s369
          %v371 = vld [vmem:[#allocation6] sm:$0xff]
          // While loop
          $region76: #{custom-call.114} parent=74 // loop_pre_header
            _
          $region77: #{custom-call.114} parent=74 // loop_header
            %s372 = sphi [#allocation6], %s394
            %s373 = sphi %s3, %s395
            %v374 = vphi %v371, %v396
            %s375 = ssub.s32 %s370, 64
            %p376 = scmp.gt.s32.totalorder %s372, %s375
          $region78: #{custom-call.114} parent=74 // loop_header_branch
            %378 = sbr.rel (%p376) target = $region82
          $region79: #{custom-call.114} parent=74 // loop_body
            %379 = vst [vmem:[%s373] sm:$0xff] %v374
            %v380 = vld [vmem:[%s372 + $0x8] sm:$0xff]
            %381 = vst [vmem:[%s373 + $0x8] sm:$0xff] %v380
            %v382 = vld [vmem:[%s372 + $0x10] sm:$0xff]
            %383 = vst [vmem:[%s373 + $0x10] sm:$0xff] %v382
            %v384 = vld [vmem:[%s372 + $0x18] sm:$0xff]
            %385 = vst [vmem:[%s373 + $0x18] sm:$0xff] %v384
            %v386 = vld [vmem:[%s372 + $0x20] sm:$0xff]
            %387 = vst [vmem:[%s373 + $0x20] sm:$0xff] %v386
            %v388 = vld [vmem:[%s372 + $0x28] sm:$0xff]
            %389 = vst [vmem:[%s373 + $0x28] sm:$0xff] %v388
            %v390 = vld [vmem:[%s372 + $0x30] sm:$0xff]
            %391 = vst [vmem:[%s373 + $0x30] sm:$0xff] %v390
            %v392 = vld [vmem:[%s372 + $0x38] sm:$0xff]
            %393 = vst [vmem:[%s373 + $0x38] sm:$0xff] %v392
          $region80: #{custom-call.114} parent=74 // loop_footer
            %s394 = scalar_lea.vmem %s372, 64
            %s395 = scalar_lea.vmem %s373, 64
            %v396 = vld [vmem:[%s372 + $0x40] sm:$0xff]
          $region81: #{custom-call.114} parent=74 // loop_footer_branch
            %397 = sbr.rel target = $region77
          $region82: #{custom-call.114} parent=74 // loop_exit
            _
          // While loop
          $region83: #{custom-call.114} parent=74 // loop_pre_header
            _
          $region84: #{custom-call.114} parent=74 // loop_header
            %s398 = sphi %s372, %s406
            %s399 = sphi %s373, %s407
            %v400 = vphi %v374, %v400
            %p401 = scmp.gt.s32.totalorder %s398, %s370
          $region85: #{custom-call.114} parent=74 // loop_header_branch
            %403 = sbr.rel (%p401) target = $region89
          $region86: #{custom-call.114} parent=74 // loop_body
            %v404 = vld [vmem:[%s398] sm:$0xff]
            %405 = vst [vmem:[%s399] sm:$0xff] %v404
          $region87: #{custom-call.114} parent=74 // loop_footer
            %s406 = scalar_lea.vmem %s398, 8
            %s407 = scalar_lea.vmem %s399, 8
          $region88: #{custom-call.114} parent=74 // loop_footer_branch
            %408 = sbr.rel target = $region84
          $region89: #{custom-call.114} parent=74 // loop_exit
            _
        $region75: #{custom-call.114} parent=70 // pred_fallthru
          _
        %s409 = sand.u32 1, 7
        %s410 = sshllo.u32 0, %s409
        %s411 = smul.u32 %s362, 128
        %s412 = sshra.s32 %s411, 4
        %s413 = scalar_lea.vmem %s3, %s412
        %s414 = smul.u32 %s362, 128
        %s415 = sshra.s32 %s414, 4
        %s416 = scalar_lea.vmem [#allocation6], %s415
        %v417 = vld [vmem:[%s416] sm:%s410]
        %418 = vst [vmem:[%s413] sm:%s410] %v417
      $region71: #{custom-call.114} parent=66 // pred_fallthru
        _
    $region67: #{custom-call.114} parent=1 // pred_fallthru
      _
    // Predicated region
    $region90: #{custom-call.114} parent=1 // pred_check
      _
    $region91: #{custom-call.114} parent=1 // pred_check_branch
      %420 = sbr.rel (0) target = $region93
    $region92: #{custom-call.114} parent=1 // pred_region
      %421 = dma.done [#allocation4], 16
    $region93: #{custom-call.114} parent=1 // pred_fallthru
      _
    // Predicated region
    $region94: #{custom-call.114} parent=1 // pred_check
      _
    $region95: #{custom-call.114} parent=1 // pred_check_branch
      %423 = sbr.rel (0) target = $region97
    $region96: #{custom-call.114} parent=1 // pred_region
      _
    $region97: #{custom-call.114} parent=1 // pred_fallthru
      _
    %424 = vsyncpa [#allocation4], 1

// kernel: jvp__.28
$region0: #{jvp__.28}
  #allocation0 [shape = 'u32[]', space=smem, size = 0x4, offset = 0x4, fixed_abs, tag = 'smem constant byte address 0x4 - core index']
  #allocation1 [shape = 'u32[144,128]{1,0:T(1,128)}', space=vmem, size = 0x12000, scoped, tag = 'internal scratch']
  %s0 = inlined_call_operand.vmem [shape: f32[9,16], index: 0, kind: input, shape index: {}]
  %s1 = inlined_call_operand.vmem [shape: f32[2,8], index: 1, kind: input, shape index: {}]
  %s2 = inlined_call_operand.vmem [shape: f32[8], index: 2, kind: input, shape index: {}]
  %s3 = inlined_call_operand.vmem [shape: f32[1,16], index: 3, kind: output, shape index: {}]
  %s4 = sld [smem:[#allocation0]]
  $region26: #{jvp__.28} parent=0
    _
  %s6 = ssub.s32 1, %s4
  %s7 = scalar_select 0, %s6, %s4
  $region1: #{jvp__.28} parent=0
    #allocation2 [shape = 'u8[512]{0}', space=smem, size = 0x200, scoped, tag = 'input window, operand 2, single buffered']
    #allocation3 [shape = 's32[1]{0}', space=sflag, size = 0x4, scoped, tag = 'scoped memory for jvp__.28']
    %8 = vsyncpa [#allocation3], 0
    // Predicated region
    $region2: #{jvp__.28} parent=1 // pred_check
      _
    $region3: #{jvp__.28} parent=1 // pred_check_branch
      %10 = sbr.rel (0) target = $region5
    $region4: #{jvp__.28} parent=1 // pred_region
      _
    $region5: #{jvp__.28} parent=1 // pred_fallthru
      _
    // Predicated region
    $region6: #{jvp__.28} parent=1 // pred_check
      _
    $region7: #{jvp__.28} parent=1 // pred_check_branch
      %12 = sbr.rel (0) target = $region9
    $region8: #{jvp__.28} parent=1 // pred_region
      _
    $region9: #{jvp__.28} parent=1 // pred_fallthru
      _
    // Predicated region
    $region10: #{jvp__.28} parent=1 // pred_check
      _
    $region11: #{jvp__.28} parent=1 // pred_check_branch
      %14 = sbr.rel (0) target = $region13
    $region12: #{jvp__.28} parent=1 // pred_region
      %s16 = ssub.s32 16, 16
      %17 = vsyncadd [#allocation3], %s16
      %s19 = sshll.u32 %s2, 4
      %s20 = int_to_ptr.vmem [resolvable:$true] %s19
      %22 = dma.vmem_to_smem %s20, 16, [#allocation2], [#allocation3]
    $region13: #{jvp__.28} parent=1 // pred_fallthru
      _
    // Predicated region
    $region14: #{jvp__.28} parent=1 // pred_check
      _
    $region15: #{jvp__.28} parent=1 // pred_check_branch
      %24 = sbr.rel (0) target = $region17
    $region16: #{jvp__.28} parent=1 // pred_region
      %25 = dma.done [#allocation3], 16
    $region17: #{jvp__.28} parent=1 // pred_fallthru
      _
    %26 = sfence
    %v27 = vld [vmem:[%s0] sm:$0xff]
    %v28 = vld [vmem:[%s0 + $0x8] sm:$0x1]
    %s29 = sld [smem:[#allocation2]]
    %s30 = sld [smem:[#allocation2 + $0x2]]
    %s31 = sld [smem:[#allocation2 + $0x4]]
    %s32 = sld [smem:[#allocation2 + $0x6]]
    %v33 = vstv %s29
    %v34 = vsub.f32 %v27, %v33
    %v35 = vmul.f32 %v34, %v34
    %v36 = vsub.f32 0.0, %v35
    %v37 = vstv %s31
    %v38 = vmul.f32 %v36, %v37
    %v39 = vmul.f32 %v38, 1.442695
    %v40 = vpow.pop %v39
    %v41 = vmul.f32 %v40, -2.0
    %v42 = vmul.f32 %v35, 2.0
    %v43 = vstv %s30
    %v44 = vsub.f32 %v43, %v42
    %v45 = vmul.f32 %v41, %v44
    %v46 = vstv %s32
    %v47 = vmul.f32 %v45, %v46
    %v48 = vadd.f32 %v47, 0.0
    %s49 = sld [smem:[#allocation2 + $0x1]]
    %s50 = sld [smem:[#allocation2 + $0x3]]
    %s51 = sld [smem:[#allocation2 + $0x5]]
    %s52 = sld [smem:[#allocation2 + $0x7]]
    %v53 = vstv %s49
    %v54 = vsub.f32 %v27, %v53
    %v55 = vmul.f32 %v54, %v54
    %v56 = vsub.f32 0.0, %v55
    %v57 = vstv %s51
    %v58 = vmul.f32 %v56, %v57
    %v59 = vmul.f32 %v58, 1.442695
    %v60 = vpow.pop %v59
    %v61 = vmul.f32 %v60, -2.0
    %v62 = vmul.f32 %v55, 2.0
    %v63 = vstv %s50
    %v64 = vsub.f32 %v63, %v62
    %v65 = vmul.f32 %v61, %v64
    %v66 = vstv %s52
    %v67 = vmul.f32 %v65, %v66
    %v68 = vadd.f32 %v48, %v67
    %v69 = vld [vmem:[%s1] sm:$0x3]
    %vm70 = vcmask 64512
    %v72 = vsel %vm70, %v69, 0
    %74 = vmatprep.subr.mxu0 0.0
    %75 = vmatpush1.msra.mxu0 %v68
    %76 = vmatprep.subr.mxu0 0.0
    %77 = vmatpush1.msra.mxu0 0.0
    %78 = vmatprep.subr.mxu0 0.0
    %79 = vmatpush1.msra.mxu0 0.0
    %80 = vmatprep.subr.mxu0 0.0
    %81 = vmatpush1.msra.mxu0 0.0
    %82 = vmatprep.subr.mxu0 0.0
    %83 = vmatpush1.msra.mxu0 0.0
    %84 = vmatprep.subr.mxu0 0.0
    %85 = vmatpush1.msra.mxu0 0.0
    %86 = vmatprep.subr.mxu0 0.0
    %87 = vmatpush1.msra.mxu0 0.0
    %88 = vmatprep.subr.mxu0 0.0
    %89 = vmatpush1.msra.mxu0 0.0
    %90 = vmatprep.subr.mxu0 0.0
    %91 = vmatpush1.msra.mxu0 0.0
    %92 = vmatprep.subr.mxu0 0.0
    %93 = vmatpush1.msra.mxu0 0.0
    %94 = vmatprep.subr.mxu0 0.0
    %95 = vmatpush1.msra.mxu0 0.0
    %96 = vmatprep.subr.mxu0 0.0
    %97 = vmatpush1.msra.mxu0 0.0
    %98 = vmatprep.subr.mxu0 0.0
    %99 = vmatpush1.msra.mxu0 0.0
    %100 = vmatprep.subr.mxu0 0.0
    %101 = vmatpush1.msra.mxu0 0.0
    %102 = vmatprep.subr.mxu0 0.0
    %103 = vmatpush1.msra.mxu0 0.0
    %104 = vmatprep.subr.mxu0 0.0
    %105 = vmatpush1.msra.mxu0 0.0
    %106 = vmatprep.subr.mxu0 0.0
    %107 = vmatpush1.msra.mxu0 0.0
    %108 = vmatprep.subr.mxu0 0.0
    %109 = vmatpush1.msra.mxu0 0.0
    %110 = vmatprep.subr.mxu0 0.0
    %111 = vmatpush1.msra.mxu0 0.0
    %112 = vmatprep.subr.mxu0 0.0
    %113 = vmatpush1.msra.mxu0 0.0
    %114 = vmatprep.subr.mxu0 0.0
    %115 = vmatpush1.msra.mxu0 0.0
    %116 = vmatprep.subr.mxu0 0.0
    %117 = vmatpush1.msra.mxu0 0.0
    %118 = vmatprep.subr.mxu0 0.0
    %119 = vmatpush1.msra.mxu0 0.0
    %120 = vmatprep.subr.mxu0 0.0
    %121 = vmatpush1.msra.mxu0 0.0
    %122 = vmatprep.subr.mxu0 0.0
    %123 = vmatpush1.msra.mxu0 0.0
    %124 = vmatprep.subr.mxu0 0.0
    %125 = vmatpush1.msra.mxu0 0.0
    %126 = vmatprep.subr.mxu0 0.0
    %127 = vmatpush1.msra.mxu0 0.0
    %128 = vmatprep.subr.mxu0 0.0
    %129 = vmatpush1.msra.mxu0 0.0
    %130 = vmatprep.subr.mxu0 0.0
    %131 = vmatpush1.msra.mxu0 0.0
    %132 = vmatprep.subr.mxu0 0.0
    %133 = vmatpush1.msra.mxu0 0.0
    %134 = vmatprep.subr.mxu0 0.0
    %135 = vmatpush1.msra.mxu0 0.0
    %136 = vmatprep.subr.mxu0 0.0
    %137 = vmatpush1.msra.mxu0 0.0
    %138 = vmatprep.mubr.f32.mxu0 0.0
    %139 = vmatmul.mubr.f32.gmra.mrb[0].mxu0 %v72
    %v140 = vpop.f32.mrb[0].mxu0
    %v141 = vadd.f32 0.0, %v140
    %v142 = vpop.f32.mrb[0].mxu0
    %143 = vdwg.mxu0
    %v144 = vlaneseq
    %v145 = vshrl.u32 %v144, 7
    %v146 = vsub.s32 0, %v145
    %v147 = vrot.slane %v28, %v146
    %v148 = vmul.f32 %v141, %v147
    %vm149 = vcmask 1025
    %150 = vst.msk [vmem:[%s3 - $0x1] sm:$0x2] %vm149, %v148
    %v152 = vrot.slane %v148, 1
    %153 = vrot.lane.b32.xlu0 %v152, 127
    %v154 = vpop.permute.xlu0 %153
    %v156 = vadd.f32 %v148, %v154
    %158 = vrot.lane.b32.xlu0 %v156, 1
    %v159 = vpop.permute.xlu0 %158
    %vm161 = vcmask 122888
    %162 = vst.msk [vmem:[%s3] sm:$0x1] %vm161, %v159
    // Predicated region
    $region18: #{jvp__.28} parent=1 // pred_check
      _
    $region19: #{jvp__.28} parent=1 // pred_check_branch
      %164 = sbr.rel (0) target = $region21
    $region20: #{jvp__.28} parent=1 // pred_region
      _
    $region21: #{jvp__.28} parent=1 // pred_fallthru
      _
    // Predicated region
    $region22: #{jvp__.28} parent=1 // pred_check
      _
    $region23: #{jvp__.28} parent=1 // pred_check_branch
      %166 = sbr.rel (0) target = $region25
    $region24: #{jvp__.28} parent=1 // pred_region
      _
    $region25: #{jvp__.28} parent=1 // pred_fallthru
      _
    %167 = vsyncpa [#allocation3], 1

// kernel: custom-call.116
$region0: #{custom-call.116}
  %s0 = inlined_call_operand.vmem [shape: f32[1,14,14], index: 0, kind: input, shape index: {}]
  %s1 = inlined_call_operand.vmem [shape: f32[1,14,14], index: 1, kind: output, shape index: {}]
  $region1: #{custom-call.116} parent=0
    #allocation0 [shape = 'u8[8192]{0}', space=vmem, size = 0x2000, scoped, tag = 'operand span for operand 0']
    #allocation1 [shape = 'u8[8192]{0}', space=vmem, size = 0x2000, scoped, tag = 'operand span for operand 1']
    #allocation2 [shape = 'f32[14,14]{1,0}', space=vmem, size = 0x2000, scoped, tag = 'rescaled input a']
    // Predicated region
    $region2: #{custom-call.116} parent=1 // pred_check
      _
    $region3: #{custom-call.116} parent=1 // pred_check_branch
      %3 = sbr.rel (0) target = $region5
    $region4: #{custom-call.116} parent=1 // pred_region
      // Predicated region
      $region6: #{custom-call.116} parent=4 // pred_check
        _
      $region7: #{custom-call.116} parent=4 // pred_check_branch
        %5 = sbr.rel (0) target = $region9
      $region8: #{custom-call.116} parent=4 // pred_region
        // Predicated region
        $region21: #{custom-call.116} parent=8 // pred_check
          _
        $region22: #{custom-call.116} parent=8 // pred_check_branch
          %22 = sbr.rel (0) target = $region24
        $region23: #{custom-call.116} parent=8 // pred_region
          loop: start=0, step=1, limit=1
          $region25: #{custom-call.116} parent=23 // loop_pre_header
            _
          $region26: #{custom-call.116} parent=23 // loop_header
            %s24 = sphi 0, %s28
            %p25 = scmp.ge.s32.totalorder %s24, 1
            %s29 = sphi %s0, %s0
            %s30 = sphi [#allocation0], [#allocation0]
          $region27: #{custom-call.116} parent=23 // loop_header_branch
            %27 = sbr.rel (%p25) target = $region31
          $region28: #{custom-call.116} parent=23 // loop_body
            %v31 = vld [vmem:[%s29] sm:$0xff]
            %32 = vst [vmem:[%s30] sm:$0xff] %v31
            %v33 = vld [vmem:[%s29 + $0x8] sm:$0xff]
            %34 = vst [vmem:[%s30 + $0x8] sm:$0xff] %v33
          $region29: #{custom-call.116} parent=23 // loop_footer
            %s28 = sadd.s32 1, %s24
          $region30: #{custom-call.116} parent=23 // loop_footer_branch
            %23 = sbr.rel target = $region26
          $region31: #{custom-call.116} parent=23 // loop_exit
            _
        $region24: #{custom-call.116} parent=8 // pred_fallthru
          _
        // Predicated region
        $region32: #{custom-call.116} parent=8 // pred_check
          _
        $region33: #{custom-call.116} parent=8 // pred_check_branch
          %36 = sbr.rel target = $region35
        $region34: #{custom-call.116} parent=8 // pred_region
          _
        $region35: #{custom-call.116} parent=8 // pred_fallthru
          _
      $region9: #{custom-call.116} parent=4 // pred_fallthru
        _
      // Predicated region
      $region10: #{custom-call.116} parent=4 // pred_check
        _
      $region11: #{custom-call.116} parent=4 // pred_check_branch
        %7 = sbr.rel target = $region13
      $region12: #{custom-call.116} parent=4 // pred_region
        loop: start=0, step=1, limit=1
        $region14: #{custom-call.116} parent=12 // loop_pre_header
          _
        $region15: #{custom-call.116} parent=12 // loop_header
          %s10 = sphi 0, %s14
          %p11 = scmp.ge.s32.totalorder %s10, 1
          %s15 = sphi %s0, %s0
          %s16 = sphi [#allocation0], [#allocation0]
        $region16: #{custom-call.116} parent=12 // loop_header_branch
          %13 = sbr.rel (%p11) target = $region20
        $region17: #{custom-call.116} parent=12 // loop_body
          %v17 = vld [vmem:[%s15] sm:$0xff]
          %18 = vst [vmem:[%s16] sm:$0xff] %v17
          %v19 = vld [vmem:[%s15 + $0x8] sm:$0xff]
          %20 = vst [vmem:[%s16 + $0x8] sm:$0xff] %v19
        $region18: #{custom-call.116} parent=12 // loop_footer
          %s14 = sadd.s32 1, %s10
        $region19: #{custom-call.116} parent=12 // loop_footer_branch
          %9 = sbr.rel target = $region15
        $region20: #{custom-call.116} parent=12 // loop_exit
          _
      $region13: #{custom-call.116} parent=4 // pred_fallthru
        _
    $region5: #{custom-call.116} parent=1 // pred_fallthru
      _
    %37 = vnop
    %v38 = vlaneseq
    %v39 = vand.u32 %v38, 127
    %vm40 = vcmp.lt.s32.totalorder %v39, 14
    %v41 = vlaneseq
    %v42 = vshrl.u32 %v41, 7
    %vm44 = vcmp.eq.s32.totalorder %v42, %v39
    %v45 = vld [vmem:[#allocation0] sm:$0xff]
    %v46 = vsel %vm44, %v45, 0.0
    %47 = vadd.xlane.f32.xlu0 %v46
    %v48 = vpop.xlane.xlu0 %47
    %vm49 = vcmp.ge.s32.totalorder %v42, %v39
    %vm50 = vmand %vm49, %vm40
    %v51 = vsel %vm50, %v45, 0.0
    %v52 = vrcp.pop %v48
    %v53 = vmul.f32 %v51, %v52
    %54 = vst [vmem:[#allocation2] sm:$0xff] %v53
    %s55 = scalar_lea.vmem [#allocation0], 8
    %s56 = scalar_lea.vmem [#allocation2], 8
    %v57 = vlaneseq
    %v58 = vshrl.u32 %v57, 7
    %v59 = vadd.s32 %v58, 8
    %vm60 = vcmp.eq.s32.totalorder %v59, %v39
    %v61 = vld [vmem:[%s55] sm:$0xff]
    %v62 = vsel %vm60, %v61, 0.0
    %63 = vadd.xlane.f32.xlu0 %v62
    %v64 = vpop.xlane.xlu0 %63
    %vm65 = vcmp.ge.s32.totalorder %v59, %v39
    %vm66 = vmand %vm65, %vm40
    %v67 = vsel %vm66, %v61, 0.0
    %v68 = vrcp.pop %v64
    %v69 = vmul.f32 %v67, %v68
    %70 = vst [vmem:[%s56] sm:$0xff] %v69
    %v71 = vlaneseq
    %v72 = vand.u32 %v71, 127
    %v73 = vlaneseq
    %v74 = vshrl.u32 %v73, 7
    %vm76 = vcmp.eq.s32.totalorder %v72, %v74
    %v77 = vlaneseq
    %v78 = vand.u32 %v77, 127
    %vm79 = vcmp.eq.s32.totalorder %v78, 0
    %v80 = vsel %vm79, 1.0, -1.0
    %v81 = vsel %vm76, %v80, 0.0
    %v82 = vlaneseq
    %v83 = vand.u32 %v82, 127
    %v84 = vlaneseq
    %v85 = vshrl.u32 %v84, 7
    %v86 = vadd.s32 %v85, 8
    %vm87 = vcmp.eq.s32.totalorder %v83, %v86
    %v88 = vsel %vm87, -1.0, 0.0
    %s89 = scalar_lea.vmem [#allocation2], 1
    %v90 = vld [vmem:[%s89] ss:$0 sm:$0xff]
    %v91 = vxor.u32 %v90, 2147483648
    %v92 = vlaneseq
    %v93 = vand.u32 %v92, 127
    %vm94 = vcmp.eq.s32.totalorder %v93, 1
    %v95 = vmul.f32 %v91, %v81
    %96 = vadd.xlane.f32.xlu0 %v95
    %v97 = vpop.xlane.xlu0 %96
    %v98 = vsel %vm94, %v97, %v81
    %s99 = scalar_lea.vmem [#allocation2], 2
    %v100 = vld [vmem:[%s99] ss:$0 sm:$0xff]
    %v101 = vxor.u32 %v100, 2147483648
    %v102 = vlaneseq
    %v103 = vand.u32 %v102, 127
    %vm104 = vcmp.eq.s32.totalorder %v103, 2
    %v105 = vmul.f32 %v101, %v98
    %106 = vadd.xlane.f32.xlu0 %v105
    %v107 = vpop.xlane.xlu0 %106
    %v108 = vsel %vm104, %v107, %v98
    %s109 = scalar_lea.vmem [#allocation2], 3
    %v110 = vld [vmem:[%s109] ss:$0 sm:$0xff]
    %v111 = vxor.u32 %v110, 2147483648
    %v112 = vlaneseq
    %v113 = vand.u32 %v112, 127
    %vm114 = vcmp.eq.s32.totalorder %v113, 3
    %v115 = vmul.f32 %v111, %v108
    %116 = vadd.xlane.f32.xlu0 %v115
    %v117 = vpop.xlane.xlu0 %116
    %v118 = vsel %vm114, %v117, %v108
    %s119 = scalar_lea.vmem [#allocation2], 4
    %v120 = vld [vmem:[%s119] ss:$0 sm:$0xff]
    %v121 = vxor.u32 %v120, 2147483648
    %v122 = vlaneseq
    %v123 = vand.u32 %v122, 127
    %vm124 = vcmp.eq.s32.totalorder %v123, 4
    %v125 = vmul.f32 %v121, %v118
    %126 = vadd.xlane.f32.xlu0 %v125
    %v127 = vpop.xlane.xlu0 %126
    %v128 = vsel %vm124, %v127, %v118
    %s129 = scalar_lea.vmem [#allocation2], 5
    %v130 = vld [vmem:[%s129] ss:$0 sm:$0xff]
    %v131 = vxor.u32 %v130, 2147483648
    %v132 = vlaneseq
    %v133 = vand.u32 %v132, 127
    %vm134 = vcmp.eq.s32.totalorder %v133, 5
    %v135 = vmul.f32 %v131, %v128
    %136 = vadd.xlane.f32.xlu0 %v135
    %v137 = vpop.xlane.xlu0 %136
    %v138 = vsel %vm134, %v137, %v128
    %s139 = scalar_lea.vmem [#allocation2], 6
    %v140 = vld [vmem:[%s139] ss:$0 sm:$0xff]
    %v141 = vxor.u32 %v140, 2147483648
    %v142 = vlaneseq
    %v143 = vand.u32 %v142, 127
    %vm144 = vcmp.eq.s32.totalorder %v143, 6
    %v145 = vmul.f32 %v141, %v138
    %146 = vadd.xlane.f32.xlu0 %v145
    %v147 = vpop.xlane.xlu0 %146
    %v148 = vsel %vm144, %v147, %v138
    %s149 = scalar_lea.vmem [#allocation2], 7
    %v150 = vld [vmem:[%s149] ss:$0 sm:$0xff]
    %v151 = vxor.u32 %v150, 2147483648
    %v152 = vlaneseq
    %v153 = vand.u32 %v152, 127
    %vm154 = vcmp.eq.s32.totalorder %v153, 7
    %v155 = vmul.f32 %v151, %v148
    %156 = vadd.xlane.f32.xlu0 %v155
    %v157 = vpop.xlane.xlu0 %156
    %v158 = vsel %vm154, %v157, %v148
    %s159 = scalar_lea.vmem [#allocation2], 8
    %v160 = vld [vmem:[%s159] ss:$0 sm:$0xff]
    %v161 = vxor.u32 %v160, 2147483648
    %v162 = vlaneseq
    %v163 = vand.u32 %v162, 127
    %vm164 = vcmp.eq.s32.totalorder %v163, 8
    %v165 = vmul.f32 %v161, %v158
    %166 = vadd.xlane.f32.xlu0 %v165
    %v167 = vpop.xlane.xlu0 %166
    %v168 = vsel %vm164, %v167, %v158
    %v169 = vmul.f32 %v161, %v88
    %170 = vadd.xlane.f32.xlu0 %v169
    %v171 = vpop.xlane.xlu0 %170
    %v172 = vsel %vm164, %v171, %v88
    %s173 = scalar_lea.vmem [#allocation2], 9
    %v174 = vld [vmem:[%s173] ss:$0 sm:$0xff]
    %v175 = vxor.u32 %v174, 2147483648
    %v176 = vlaneseq
    %v177 = vand.u32 %v176, 127
    %vm178 = vcmp.eq.s32.totalorder %v177, 9
    %v179 = vmul.f32 %v175, %v168
    %180 = vadd.xlane.f32.xlu0 %v179
    %v181 = vpop.xlane.xlu0 %180
    %v182 = vsel %vm178, %v181, %v168
    %v183 = vmul.f32 %v175, %v172
    %184 = vadd.xlane.f32.xlu0 %v183
    %v185 = vpop.xlane.xlu0 %184
    %v186 = vsel %vm178, %v185, %v172
    %s187 = scalar_lea.vmem [#allocation2], 10
    %v188 = vld [vmem:[%s187] ss:$0 sm:$0xff]
    %v189 = vxor.u32 %v188, 2147483648
    %v190 = vlaneseq
    %v191 = vand.u32 %v190, 127
    %vm192 = vcmp.eq.s32.totalorder %v191, 10
    %v193 = vmul.f32 %v189, %v182
    %194 = vadd.xlane.f32.xlu0 %v193
    %v195 = vpop.xlane.xlu0 %194
    %v196 = vsel %vm192, %v195, %v182
    %v197 = vmul.f32 %v189, %v186
    %198 = vadd.xlane.f32.xlu0 %v197
    %v199 = vpop.xlane.xlu0 %198
    %v200 = vsel %vm192, %v199, %v186
    %s201 = scalar_lea.vmem [#allocation2], 11
    %v202 = vld [vmem:[%s201] ss:$0 sm:$0xff]
    %v203 = vxor.u32 %v202, 2147483648
    %v204 = vlaneseq
    %v205 = vand.u32 %v204, 127
    %vm206 = vcmp.eq.s32.totalorder %v205, 11
    %v207 = vmul.f32 %v203, %v196
    %208 = vadd.xlane.f32.xlu0 %v207
    %v209 = vpop.xlane.xlu0 %208
    %v210 = vsel %vm206, %v209, %v196
    %v211 = vmul.f32 %v203, %v200
    %212 = vadd.xlane.f32.xlu0 %v211
    %v213 = vpop.xlane.xlu0 %212
    %v214 = vsel %vm206, %v213, %v200
    %s215 = scalar_lea.vmem [#allocation2], 12
    %v216 = vld [vmem:[%s215] ss:$0 sm:$0xff]
    %v217 = vxor.u32 %v216, 2147483648
    %v218 = vlaneseq
    %v219 = vand.u32 %v218, 127
    %vm220 = vcmp.eq.s32.totalorder %v219, 12
    %v221 = vmul.f32 %v217, %v210
    %222 = vadd.xlane.f32.xlu0 %v221
    %v223 = vpop.xlane.xlu0 %222
    %v224 = vsel %vm220, %v223, %v210
    %v225 = vmul.f32 %v217, %v214
    %226 = vadd.xlane.f32.xlu0 %v225
    %v227 = vpop.xlane.xlu0 %226
    %v228 = vsel %vm220, %v227, %v214
    %s229 = scalar_lea.vmem [#allocation2], 13
    %v230 = vld [vmem:[%s229] ss:$0 sm:$0xff]
    %v231 = vxor.u32 %v230, 2147483648
    %v232 = vlaneseq
    %v233 = vand.u32 %v232, 127
    %vm234 = vcmp.eq.s32.totalorder %v233, 13
    %v235 = vmul.f32 %v231, %v224
    %236 = vadd.xlane.f32.xlu0 %v235
    %v237 = vpop.xlane.xlu0 %236
    %v238 = vsel %vm234, %v237, %v224
    %v239 = vmul.f32 %v231, %v228
    %240 = vadd.xlane.f32.xlu0 %v239
    %v241 = vpop.xlane.xlu0 %240
    %v242 = vsel %vm234, %v241, %v228
    %v243 = vrcp.pop %v48
    %v244 = vmul.f32 %v238, %v243
    %vm245 = vweird.f32 %v48
    %v246 = vsel %vm245, %v238, %v244
    %247 = vst [vmem:[#allocation1] sm:$0xff] %v246
    %v248 = vrcp.pop %v64
    %v249 = vmul.f32 %v242, %v248
    %vm250 = vweird.f32 %v64
    %v251 = vsel %vm250, %v242, %v249
    %s252 = scalar_lea.vmem [#allocation1], 8
    %253 = vst [vmem:[%s252] sm:$0xff] %v251
    // Predicated region
    $region36: #{custom-call.116} parent=1 // pred_check
      _
    $region37: #{custom-call.116} parent=1 // pred_check_branch
      %255 = sbr.rel (0) target = $region39
    $region38: #{custom-call.116} parent=1 // pred_region
      // Predicated region
      $region40: #{custom-call.116} parent=38 // pred_check
        _
      $region41: #{custom-call.116} parent=38 // pred_check_branch
        %257 = sbr.rel (0) target = $region43
      $region42: #{custom-call.116} parent=38 // pred_region
        // Predicated region
        $region55: #{custom-call.116} parent=42 // pred_check
          _
        $region56: #{custom-call.116} parent=42 // pred_check_branch
          %274 = sbr.rel (0) target = $region58
        $region57: #{custom-call.116} parent=42 // pred_region
          loop: start=0, step=1, limit=1
          $region59: #{custom-call.116} parent=57 // loop_pre_header
            _
          $region60: #{custom-call.116} parent=57 // loop_header
            %s276 = sphi 0, %s280
            %p277 = scmp.ge.s32.totalorder %s276, 1
            %s281 = sphi [#allocation1], [#allocation1]
            %s282 = sphi %s1, %s1
          $region61: #{custom-call.116} parent=57 // loop_header_branch
            %279 = sbr.rel (%p277) target = $region65
          $region62: #{custom-call.116} parent=57 // loop_body
            %v283 = vld [vmem:[%s281] sm:$0xff]
            %284 = vst [vmem:[%s282] sm:$0xff] %v283
            %v285 = vld [vmem:[%s281 + $0x8] sm:$0xff]
            %286 = vst [vmem:[%s282 + $0x8] sm:$0xff] %v285
          $region63: #{custom-call.116} parent=57 // loop_footer
            %s280 = sadd.s32 1, %s276
          $region64: #{custom-call.116} parent=57 // loop_footer_branch
            %275 = sbr.rel target = $region60
          $region65: #{custom-call.116} parent=57 // loop_exit
            _
        $region58: #{custom-call.116} parent=42 // pred_fallthru
          _
        // Predicated region
        $region66: #{custom-call.116} parent=42 // pred_check
          _
        $region67: #{custom-call.116} parent=42 // pred_check_branch
          %288 = sbr.rel target = $region69
        $region68: #{custom-call.116} parent=42 // pred_region
          _
        $region69: #{custom-call.116} parent=42 // pred_fallthru
          _
      $region43: #{custom-call.116} parent=38 // pred_fallthru
        _
      // Predicated region
      $region44: #{custom-call.116} parent=38 // pred_check
        _
      $region45: #{custom-call.116} parent=38 // pred_check_branch
        %259 = sbr.rel target = $region47
      $region46: #{custom-call.116} parent=38 // pred_region
        loop: start=0, step=1, limit=1
        $region48: #{custom-call.116} parent=46 // loop_pre_header
          _
        $region49: #{custom-call.116} parent=46 // loop_header
          %s262 = sphi 0, %s266
          %p263 = scmp.ge.s32.totalorder %s262, 1
          %s267 = sphi [#allocation1], [#allocation1]
          %s268 = sphi %s1, %s1
        $region50: #{custom-call.116} parent=46 // loop_header_branch
          %265 = sbr.rel (%p263) target = $region54
        $region51: #{custom-call.116} parent=46 // loop_body
          %v269 = vld [vmem:[%s267] sm:$0xff]
          %270 = vst [vmem:[%s268] sm:$0xff] %v269
          %v271 = vld [vmem:[%s267 + $0x8] sm:$0xff]
          %272 = vst [vmem:[%s268 + $0x8] sm:$0xff] %v271
        $region52: #{custom-call.116} parent=46 // loop_footer
          %s266 = sadd.s32 1, %s262
        $region53: #{custom-call.116} parent=46 // loop_footer_branch
          %261 = sbr.rel target = $region49
        $region54: #{custom-call.116} parent=46 // loop_exit
          _
      $region47: #{custom-call.116} parent=38 // pred_fallthru
        _
    $region39: #{custom-call.116} parent=1 // pred_fallthru
      _
    %289 = vnop

// kernel: custom-call.115
$region0: #{custom-call.115}
  %s0 = inlined_call_operand.vmem [shape: f32[1,14,14], index: 0, kind: input, shape index: {}]
  %s1 = inlined_call_operand.vmem [shape: f32[1,14,14], index: 1, kind: output, shape index: {}]
  $region1: #{custom-call.115} parent=0
    #allocation0 [shape = 'u8[8192]{0}', space=vmem, size = 0x2000, scoped, tag = 'operand span for operand 0']
    #allocation1 [shape = 'u8[8192]{0}', space=vmem, size = 0x2000, scoped, tag = 'operand span for operand 1']
    #allocation2 [shape = 'f32[14,14]{1,0}', space=vmem, size = 0x2000, scoped, tag = 'rescaled input a']
    // Predicated region
    $region2: #{custom-call.115} parent=1 // pred_check
      _
    $region3: #{custom-call.115} parent=1 // pred_check_branch
      %3 = sbr.rel (0) target = $region5
    $region4: #{custom-call.115} parent=1 // pred_region
      // Predicated region
      $region6: #{custom-call.115} parent=4 // pred_check
        _
      $region7: #{custom-call.115} parent=4 // pred_check_branch
        %5 = sbr.rel (0) target = $region9
      $region8: #{custom-call.115} parent=4 // pred_region
        // Predicated region
        $region21: #{custom-call.115} parent=8 // pred_check
          _
        $region22: #{custom-call.115} parent=8 // pred_check_branch
          %22 = sbr.rel (0) target = $region24
        $region23: #{custom-call.115} parent=8 // pred_region
          loop: start=0, step=1, limit=1
          $region25: #{custom-call.115} parent=23 // loop_pre_header
            _
          $region26: #{custom-call.115} parent=23 // loop_header
            %s24 = sphi 0, %s28
            %p25 = scmp.ge.s32.totalorder %s24, 1
            %s29 = sphi %s0, %s0
            %s30 = sphi [#allocation0], [#allocation0]
          $region27: #{custom-call.115} parent=23 // loop_header_branch
            %27 = sbr.rel (%p25) target = $region31
          $region28: #{custom-call.115} parent=23 // loop_body
            %v31 = vld [vmem:[%s29] sm:$0xff]
            %32 = vst [vmem:[%s30] sm:$0xff] %v31
            %v33 = vld [vmem:[%s29 + $0x8] sm:$0xff]
            %34 = vst [vmem:[%s30 + $0x8] sm:$0xff] %v33
          $region29: #{custom-call.115} parent=23 // loop_footer
            %s28 = sadd.s32 1, %s24
          $region30: #{custom-call.115} parent=23 // loop_footer_branch
            %23 = sbr.rel target = $region26
          $region31: #{custom-call.115} parent=23 // loop_exit
            _
        $region24: #{custom-call.115} parent=8 // pred_fallthru
          _
        // Predicated region
        $region32: #{custom-call.115} parent=8 // pred_check
          _
        $region33: #{custom-call.115} parent=8 // pred_check_branch
          %36 = sbr.rel target = $region35
        $region34: #{custom-call.115} parent=8 // pred_region
          _
        $region35: #{custom-call.115} parent=8 // pred_fallthru
          _
      $region9: #{custom-call.115} parent=4 // pred_fallthru
        _
      // Predicated region
      $region10: #{custom-call.115} parent=4 // pred_check
        _
      $region11: #{custom-call.115} parent=4 // pred_check_branch
        %7 = sbr.rel target = $region13
      $region12: #{custom-call.115} parent=4 // pred_region
        loop: start=0, step=1, limit=1
        $region14: #{custom-call.115} parent=12 // loop_pre_header
          _
        $region15: #{custom-call.115} parent=12 // loop_header
          %s10 = sphi 0, %s14
          %p11 = scmp.ge.s32.totalorder %s10, 1
          %s15 = sphi %s0, %s0
          %s16 = sphi [#allocation0], [#allocation0]
        $region16: #{custom-call.115} parent=12 // loop_header_branch
          %13 = sbr.rel (%p11) target = $region20
        $region17: #{custom-call.115} parent=12 // loop_body
          %v17 = vld [vmem:[%s15] sm:$0xff]
          %18 = vst [vmem:[%s16] sm:$0xff] %v17
          %v19 = vld [vmem:[%s15 + $0x8] sm:$0xff]
          %20 = vst [vmem:[%s16 + $0x8] sm:$0xff] %v19
        $region18: #{custom-call.115} parent=12 // loop_footer
          %s14 = sadd.s32 1, %s10
        $region19: #{custom-call.115} parent=12 // loop_footer_branch
          %9 = sbr.rel target = $region15
        $region20: #{custom-call.115} parent=12 // loop_exit
          _
      $region13: #{custom-call.115} parent=4 // pred_fallthru
        _
    $region5: #{custom-call.115} parent=1 // pred_fallthru
      _
    %37 = vnop
    %v38 = vlaneseq
    %v39 = vand.u32 %v38, 127
    %vm40 = vcmp.lt.s32.totalorder %v39, 14
    %v41 = vlaneseq
    %v42 = vshrl.u32 %v41, 7
    %vm44 = vcmp.eq.s32.totalorder %v42, %v39
    %v45 = vld [vmem:[#allocation0] sm:$0xff]
    %v46 = vsel %vm44, %v45, 0.0
    %47 = vadd.xlane.f32.xlu0 %v46
    %v48 = vpop.xlane.xlu0 %47
    %vm49 = vcmp.le.s32.totalorder %v42, %v39
    %vm50 = vmand %vm49, %vm40
    %v51 = vsel %vm50, %v45, 0.0
    %v52 = vrcp.pop %v48
    %v53 = vmul.f32 %v51, %v52
    %54 = vst [vmem:[#allocation2] sm:$0xff] %v53
    %s55 = scalar_lea.vmem [#allocation0], 8
    %s56 = scalar_lea.vmem [#allocation2], 8
    %v57 = vlaneseq
    %v58 = vshrl.u32 %v57, 7
    %v59 = vadd.s32 %v58, 8
    %vm60 = vcmp.eq.s32.totalorder %v59, %v39
    %v61 = vld [vmem:[%s55] sm:$0xff]
    %v62 = vsel %vm60, %v61, 0.0
    %63 = vadd.xlane.f32.xlu0 %v62
    %v64 = vpop.xlane.xlu0 %63
    %vm65 = vcmp.le.s32.totalorder %v59, %v39
    %vm66 = vmand %vm65, %vm40
    %v67 = vsel %vm66, %v61, 0.0
    %v68 = vrcp.pop %v64
    %v69 = vmul.f32 %v67, %v68
    %70 = vst [vmem:[%s56] sm:$0xff] %v69
    %v71 = vlaneseq
    %v72 = vand.u32 %v71, 127
    %v73 = vlaneseq
    %v74 = vshrl.u32 %v73, 7
    %vm76 = vcmp.eq.s32.totalorder %v72, %v74
    %v77 = vsel %vm76, -1.0, 0.0
    %v78 = vlaneseq
    %v79 = vand.u32 %v78, 127
    %v80 = vlaneseq
    %v81 = vshrl.u32 %v80, 7
    %v82 = vadd.s32 %v81, 8
    %vm83 = vcmp.eq.s32.totalorder %v79, %v82
    %v84 = vlaneseq
    %v85 = vand.u32 %v84, 127
    %vm86 = vcmp.eq.s32.totalorder %v85, 13
    %v87 = vsel %vm86, 1.0, -1.0
    %v88 = vsel %vm83, %v87, 0.0
    %s89 = scalar_lea.vmem [#allocation2], 12
    %v90 = vld [vmem:[%s89] ss:$0 sm:$0xff]
    %v91 = vxor.u32 %v90, 2147483648
    %v92 = vlaneseq
    %v93 = vand.u32 %v92, 127
    %vm94 = vcmp.eq.s32.totalorder %v93, 12
    %v95 = vmul.f32 %v91, %v88
    %96 = vadd.xlane.f32.xlu0 %v95
    %v97 = vpop.xlane.xlu0 %96
    %v98 = vsel %vm94, %v97, %v88
    %s99 = scalar_lea.vmem [#allocation2], 11
    %v100 = vld [vmem:[%s99] ss:$0 sm:$0xff]
    %v101 = vxor.u32 %v100, 2147483648
    %v102 = vlaneseq
    %v103 = vand.u32 %v102, 127
    %vm104 = vcmp.eq.s32.totalorder %v103, 11
    %v105 = vmul.f32 %v101, %v98
    %106 = vadd.xlane.f32.xlu0 %v105
    %v107 = vpop.xlane.xlu0 %106
    %v108 = vsel %vm104, %v107, %v98
    %s109 = scalar_lea.vmem [#allocation2], 10
    %v110 = vld [vmem:[%s109] ss:$0 sm:$0xff]
    %v111 = vxor.u32 %v110, 2147483648
    %v112 = vlaneseq
    %v113 = vand.u32 %v112, 127
    %vm114 = vcmp.eq.s32.totalorder %v113, 10
    %v115 = vmul.f32 %v111, %v108
    %116 = vadd.xlane.f32.xlu0 %v115
    %v117 = vpop.xlane.xlu0 %116
    %v118 = vsel %vm114, %v117, %v108
    %s119 = scalar_lea.vmem [#allocation2], 9
    %v120 = vld [vmem:[%s119] ss:$0 sm:$0xff]
    %v121 = vxor.u32 %v120, 2147483648
    %v122 = vlaneseq
    %v123 = vand.u32 %v122, 127
    %vm124 = vcmp.eq.s32.totalorder %v123, 9
    %v125 = vmul.f32 %v121, %v118
    %126 = vadd.xlane.f32.xlu0 %v125
    %v127 = vpop.xlane.xlu0 %126
    %v128 = vsel %vm124, %v127, %v118
    %s129 = scalar_lea.vmem [#allocation2], 8
    %v130 = vld [vmem:[%s129] ss:$0 sm:$0xff]
    %v131 = vxor.u32 %v130, 2147483648
    %v132 = vlaneseq
    %v133 = vand.u32 %v132, 127
    %vm134 = vcmp.eq.s32.totalorder %v133, 8
    %v135 = vmul.f32 %v131, %v128
    %136 = vadd.xlane.f32.xlu0 %v135
    %v137 = vpop.xlane.xlu0 %136
    %v138 = vsel %vm134, %v137, %v128
    %s139 = scalar_lea.vmem [#allocation2], 7
    %v140 = vld [vmem:[%s139] ss:$0 sm:$0xff]
    %v141 = vxor.u32 %v140, 2147483648
    %v142 = vlaneseq
    %v143 = vand.u32 %v142, 127
    %vm144 = vcmp.eq.s32.totalorder %v143, 7
    %v145 = vmul.f32 %v141, %v77
    %146 = vadd.xlane.f32.xlu0 %v145
    %v147 = vpop.xlane.xlu0 %146
    %v148 = vsel %vm144, %v147, %v77
    %v149 = vmul.f32 %v141, %v138
    %150 = vadd.xlane.f32.xlu0 %v149
    %v151 = vpop.xlane.xlu0 %150
    %v152 = vsel %vm144, %v151, %v138
    %s153 = scalar_lea.vmem [#allocation2], 6
    %v154 = vld [vmem:[%s153] ss:$0 sm:$0xff]
    %v155 = vxor.u32 %v154, 2147483648
    %v156 = vlaneseq
    %v157 = vand.u32 %v156, 127
    %vm158 = vcmp.eq.s32.totalorder %v157, 6
    %v159 = vmul.f32 %v155, %v148
    %160 = vadd.xlane.f32.xlu0 %v159
    %v161 = vpop.xlane.xlu0 %160
    %v162 = vsel %vm158, %v161, %v148
    %v163 = vmul.f32 %v155, %v152
    %164 = vadd.xlane.f32.xlu0 %v163
    %v165 = vpop.xlane.xlu0 %164
    %v166 = vsel %vm158, %v165, %v152
    %s167 = scalar_lea.vmem [#allocation2], 5
    %v168 = vld [vmem:[%s167] ss:$0 sm:$0xff]
    %v169 = vxor.u32 %v168, 2147483648
    %v170 = vlaneseq
    %v171 = vand.u32 %v170, 127
    %vm172 = vcmp.eq.s32.totalorder %v171, 5
    %v173 = vmul.f32 %v169, %v162
    %174 = vadd.xlane.f32.xlu0 %v173
    %v175 = vpop.xlane.xlu0 %174
    %v176 = vsel %vm172, %v175, %v162
    %v177 = vmul.f32 %v169, %v166
    %178 = vadd.xlane.f32.xlu0 %v177
    %v179 = vpop.xlane.xlu0 %178
    %v180 = vsel %vm172, %v179, %v166
    %s181 = scalar_lea.vmem [#allocation2], 4
    %v182 = vld [vmem:[%s181] ss:$0 sm:$0xff]
    %v183 = vxor.u32 %v182, 2147483648
    %v184 = vlaneseq
    %v185 = vand.u32 %v184, 127
    %vm186 = vcmp.eq.s32.totalorder %v185, 4
    %v187 = vmul.f32 %v183, %v176
    %188 = vadd.xlane.f32.xlu0 %v187
    %v189 = vpop.xlane.xlu0 %188
    %v190 = vsel %vm186, %v189, %v176
    %v191 = vmul.f32 %v183, %v180
    %192 = vadd.xlane.f32.xlu0 %v191
    %v193 = vpop.xlane.xlu0 %192
    %v194 = vsel %vm186, %v193, %v180
    %s195 = scalar_lea.vmem [#allocation2], 3
    %v196 = vld [vmem:[%s195] ss:$0 sm:$0xff]
    %v197 = vxor.u32 %v196, 2147483648
    %v198 = vlaneseq
    %v199 = vand.u32 %v198, 127
    %vm200 = vcmp.eq.s32.totalorder %v199, 3
    %v201 = vmul.f32 %v197, %v190
    %202 = vadd.xlane.f32.xlu0 %v201
    %v203 = vpop.xlane.xlu0 %202
    %v204 = vsel %vm200, %v203, %v190
    %v205 = vmul.f32 %v197, %v194
    %206 = vadd.xlane.f32.xlu0 %v205
    %v207 = vpop.xlane.xlu0 %206
    %v208 = vsel %vm200, %v207, %v194
    %s209 = scalar_lea.vmem [#allocation2], 2
    %v210 = vld [vmem:[%s209] ss:$0 sm:$0xff]
    %v211 = vxor.u32 %v210, 2147483648
    %v212 = vlaneseq
    %v213 = vand.u32 %v212, 127
    %vm214 = vcmp.eq.s32.totalorder %v213, 2
    %v215 = vmul.f32 %v211, %v204
    %216 = vadd.xlane.f32.xlu0 %v215
    %v217 = vpop.xlane.xlu0 %216
    %v218 = vsel %vm214, %v217, %v204
    %v219 = vmul.f32 %v211, %v208
    %220 = vadd.xlane.f32.xlu0 %v219
    %v221 = vpop.xlane.xlu0 %220
    %v222 = vsel %vm214, %v221, %v208
    %s223 = scalar_lea.vmem [#allocation2], 1
    %v224 = vld [vmem:[%s223] ss:$0 sm:$0xff]
    %v225 = vxor.u32 %v224, 2147483648
    %v226 = vlaneseq
    %v227 = vand.u32 %v226, 127
    %vm228 = vcmp.eq.s32.totalorder %v227, 1
    %v229 = vmul.f32 %v225, %v218
    %230 = vadd.xlane.f32.xlu0 %v229
    %v231 = vpop.xlane.xlu0 %230
    %v232 = vsel %vm228, %v231, %v218
    %v233 = vmul.f32 %v225, %v222
    %234 = vadd.xlane.f32.xlu0 %v233
    %v235 = vpop.xlane.xlu0 %234
    %v236 = vsel %vm228, %v235, %v222
    %v237 = vld [vmem:[#allocation2] ss:$0 sm:$0xff]
    %v238 = vxor.u32 %v237, 2147483648
    %v239 = vlaneseq
    %v240 = vand.u32 %v239, 127
    %vm241 = vcmp.eq.s32.totalorder %v240, 0
    %v242 = vmul.f32 %v238, %v232
    %243 = vadd.xlane.f32.xlu0 %v242
    %v244 = vpop.xlane.xlu0 %243
    %v245 = vsel %vm241, %v244, %v232
    %v246 = vmul.f32 %v238, %v236
    %247 = vadd.xlane.f32.xlu0 %v246
    %v248 = vpop.xlane.xlu0 %247
    %v249 = vsel %vm241, %v248, %v236
    %v250 = vrcp.pop %v48
    %v251 = vmul.f32 %v245, %v250
    %vm252 = vweird.f32 %v48
    %v253 = vsel %vm252, %v245, %v251
    %254 = vst [vmem:[#allocation1] sm:$0xff] %v253
    %v255 = vrcp.pop %v64
    %v256 = vmul.f32 %v249, %v255
    %vm257 = vweird.f32 %v64
    %v258 = vsel %vm257, %v249, %v256
    %s259 = scalar_lea.vmem [#allocation1], 8
    %260 = vst [vmem:[%s259] sm:$0xff] %v258
    // Predicated region
    $region36: #{custom-call.115} parent=1 // pred_check
      _
    $region37: #{custom-call.115} parent=1 // pred_check_branch
      %262 = sbr.rel (0) target = $region39
    $region38: #{custom-call.115} parent=1 // pred_region
      // Predicated region
      $region40: #{custom-call.115} parent=38 // pred_check
        _
      $region41: #{custom-call.115} parent=38 // pred_check_branch
        %264 = sbr.rel (0) target = $region43
      $region42: #{custom-call.115} parent=38 // pred_region
        // Predicated region
        $region55: #{custom-call.115} parent=42 // pred_check
          _
        $region56: #{custom-call.115} parent=42 // pred_check_branch
          %281 = sbr.rel (0) target = $region58
        $region57: #{custom-call.115} parent=42 // pred_region
          loop: start=0, step=1, limit=1
          $region59: #{custom-call.115} parent=57 // loop_pre_header
            _
          $region60: #{custom-call.115} parent=57 // loop_header
            %s283 = sphi 0, %s287
            %p284 = scmp.ge.s32.totalorder %s283, 1
            %s288 = sphi [#allocation1], [#allocation1]
            %s289 = sphi %s1, %s1
          $region61: #{custom-call.115} parent=57 // loop_header_branch
            %286 = sbr.rel (%p284) target = $region65
          $region62: #{custom-call.115} parent=57 // loop_body
            %v290 = vld [vmem:[%s288] sm:$0xff]
            %291 = vst [vmem:[%s289] sm:$0xff] %v290
            %v292 = vld [vmem:[%s288 + $0x8] sm:$0xff]
            %293 = vst [vmem:[%s289 + $0x8] sm:$0xff] %v292
          $region63: #{custom-call.115} parent=57 // loop_footer
            %s287 = sadd.s32 1, %s283
          $region64: #{custom-call.115} parent=57 // loop_footer_branch
            %282 = sbr.rel target = $region60
          $region65: #{custom-call.115} parent=57 // loop_exit
            _
        $region58: #{custom-call.115} parent=42 // pred_fallthru
          _
        // Predicated region
        $region66: #{custom-call.115} parent=42 // pred_check
          _
        $region67: #{custom-call.115} parent=42 // pred_check_branch
          %295 = sbr.rel target = $region69
        $region68: #{custom-call.115} parent=42 // pred_region
          _
        $region69: #{custom-call.115} parent=42 // pred_fallthru
          _
      $region43: #{custom-call.115} parent=38 // pred_fallthru
        _
      // Predicated region
      $region44: #{custom-call.115} parent=38 // pred_check
        _
      $region45: #{custom-call.115} parent=38 // pred_check_branch
        %266 = sbr.rel target = $region47
      $region46: #{custom-call.115} parent=38 // pred_region
        loop: start=0, step=1, limit=1
        $region48: #{custom-call.115} parent=46 // loop_pre_header
          _
        $region49: #{custom-call.115} parent=46 // loop_header
          %s269 = sphi 0, %s273
          %p270 = scmp.ge.s32.totalorder %s269, 1
          %s274 = sphi [#allocation1], [#allocation1]
          %s275 = sphi %s1, %s1
        $region50: #{custom-call.115} parent=46 // loop_header_branch
          %272 = sbr.rel (%p270) target = $region54
        $region51: #{custom-call.115} parent=46 // loop_body
          %v276 = vld [vmem:[%s274] sm:$0xff]
          %277 = vst [vmem:[%s275] sm:$0xff] %v276
          %v278 = vld [vmem:[%s274 + $0x8] sm:$0xff]
          %279 = vst [vmem:[%s275 + $0x8] sm:$0xff] %v278
        $region52: #{custom-call.115} parent=46 // loop_footer
          %s273 = sadd.s32 1, %s269
        $region53: #{custom-call.115} parent=46 // loop_footer_branch
          %268 = sbr.rel target = $region49
        $region54: #{custom-call.115} parent=46 // loop_exit
          _
      $region47: #{custom-call.115} parent=38 // pred_fallthru
        _
    $region39: #{custom-call.115} parent=1 // pred_fallthru
      _
    %296 = vnop

// kernel: split.126
$region0: #{split.126}
  #allocation0 [shape = 'u32[2048]{0}', space=vmem, size = 0x2000, scoped, tag = 'scoped memory for split.126']
  #allocation1 [shape = 'u32[2048]{0}', space=vmem, size = 0x2000, scoped, tag = 'scoped memory for split.126']
  #allocation2 [shape = 'u32[2048]{0}', space=vmem, size = 0x2000, scoped, tag = 'scoped memory for split.126']
  #allocation3 [shape = 'u32[2048]{0}', space=vmem, size = 0x2000, scoped, tag = 'scoped memory for split.126']
  #allocation4 [shape = 'u32[2048]{0}', space=vmem, size = 0x2000, scoped, tag = 'scoped memory for split.126']
  #allocation5 [shape = 's32[1]{0}', space=sflag, size = 0x4, scoped, tag = 'scoped memory for split.126']
  %s0 = inlined_call_operand.vmem [shape: f32[16], index: 0, kind: input, shape index: {}]
  %s1 = inlined_call_operand.vmem [shape: f32[14], index: 1, kind: output, shape index: {}]
  %v2 = vld [vmem:[%s0] sm:$0x1]
  %vm3 = vcmask 1040384
  %v4 = vsel %vm3, 0, %v2
  %v5 = vrot.slane %v4, 1
  %v6 = vlaneseq
  %v7 = vand.u32 %v6, 127
  %vm8 = vcmp.lt.s32.totalorder %v7, 1
  %v9 = vsel %vm8, %v5, %v2
  %10 = vrot.lane.b32.xlu0 %v9, 127
  %v11 = vpop.permute.xlu0 %10
  %12 = vst [vmem:[%s1] sm:$0x1] %v11

// kernel: neg.471
$region0: #{neg.471}
  #allocation0 [shape = 's32[1]{0}', space=sflag, size = 0x4, scoped, tag = 'scoped memory for neg.471']
  %s0 = inlined_call_operand.vmem [shape: f32[14], index: 0, kind: input, shape index: {}]
  %s1 = inlined_call_operand.vmem [shape: f32[14], index: 1, kind: output, shape index: {}]
  %v2 = vld [vmem:[%s0] sm:$0x1]
  %3 = xla_tuple %v2
  %4 = xla_tuple %3
  %v5 = vxor.u32 %v2, 2147483648
  %6 = xla_tuple %v5
  %7 = vst [vmem:[%s1] sm:$0x1] %v5

// kernel: neg.472
$region0: #{neg.472}
  #allocation0 [shape = 's32[1]{0}', space=sflag, size = 0x4, scoped, tag = 'scoped memory for neg.472']
  %s0 = inlined_call_operand.vmem [shape: f32[15], index: 0, kind: input, shape index: {}]
  %s1 = inlined_call_operand.vmem [shape: f32[15], index: 1, kind: output, shape index: {}]
  %v2 = vld [vmem:[%s0] sm:$0x1]
  %3 = xla_tuple %v2
  %4 = xla_tuple %3
  %v5 = vxor.u32 %v2, 2147483648
  %6 = xla_tuple %v5
  %7 = vst [vmem:[%s1] sm:$0x1] %v5

// kernel: jvp__.29
$region0: #{jvp__.29}
  #allocation0 [shape = 'u32[]', space=smem, size = 0x4, offset = 0x4, fixed_abs, tag = 'smem constant byte address 0x4 - core index']
  #allocation1 [shape = 'u32[144,128]{1,0:T(1,128)}', space=vmem, size = 0x12000, scoped, tag = 'internal scratch']
  %s0 = inlined_call_operand.vmem [shape: f32[32,1], index: 0, kind: input, shape index: {}]
  %s1 = inlined_call_operand.vmem [shape: f32[8,16], index: 1, kind: input, shape index: {}]
  %s2 = inlined_call_operand.vmem [shape: f32[8,128], index: 2, kind: input, shape index: {}]
  %s3 = inlined_call_operand.vmem [shape: f32[1,128], index: 3, kind: output, shape index: {0}]
  %s4 = inlined_call_operand.hbm [shape: f32[1,1], index: 4, kind: output, shape index: {1}]
  %5 = xla_tuple %s3, %s4
  %s6 = sld [smem:[#allocation0]]
  $region30: #{jvp__.29} parent=0
    _
  %s8 = ssub.s32 1, %s6
  %s9 = scalar_select 0, %s8, %s6
  $region1: #{jvp__.29} parent=0
    #allocation2 [shape = 'u8[512]{0}', space=vmem, size = 0x400, scoped, tag = 'output window, operand 1, single buffered']
    #allocation3 [shape = 's32[1]{0}', space=sflag, size = 0x4, scoped, tag = 'scoped memory for jvp__.29']
    %10 = vsyncpa [#allocation3], 0
    // Predicated region
    $region2: #{jvp__.29} parent=1 // pred_check
      _
    $region3: #{jvp__.29} parent=1 // pred_check_branch
      %12 = sbr.rel (0) target = $region5
    $region4: #{jvp__.29} parent=1 // pred_region
      _
    $region5: #{jvp__.29} parent=1 // pred_fallthru
      _
    // Predicated region
    $region6: #{jvp__.29} parent=1 // pred_check
      _
    $region7: #{jvp__.29} parent=1 // pred_check_branch
      %14 = sbr.rel (0) target = $region9
    $region8: #{jvp__.29} parent=1 // pred_region
      _
    $region9: #{jvp__.29} parent=1 // pred_fallthru
      _
    // Predicated region
    $region10: #{jvp__.29} parent=1 // pred_check
      _
    $region11: #{jvp__.29} parent=1 // pred_check_branch
      %16 = sbr.rel (0) target = $region13
    $region12: #{jvp__.29} parent=1 // pred_region
      _
    $region13: #{jvp__.29} parent=1 // pred_fallthru
      _
    %v17 = vld [vmem:[%s2] sm:$0x1]
    %v18 = vld [vmem:[%s2 + $0x1] sm:$0x1]
    %v19 = vld [vmem:[%s2 + $0x2] sm:$0x1]
    %v20 = vld [vmem:[%s0] sm:$0xff]
    %v21 = vld [vmem:[%s0 + $0x8] sm:$0xff]
    %v22 = vld [vmem:[%s0 + $0x10] sm:$0xff]
    %v23 = vld [vmem:[%s0 + $0x18] sm:$0xff]
    %25 = vset.pattern.permute.xlu0 0
    %26 = vperm.xlu0 %25, %v20
    %v27 = vpop.permute.xlu0 %26
    %30 = vset.pattern.permute.xlu0 0
    %31 = vperm.xlu0 %30, %v21
    %v32 = vpop.permute.xlu0 %31
    %v34 = vlaneseq
    %v35 = vshrl.u32 %v34, 7
    %v36 = vsub.s32 0, %v35
    %v37 = vrot.slane %v17, %v36
    %vm38 = vcmp.lt.f32.partialorder %v27, %v37
    %vm39 = vcmp.lt.f32.partialorder %v32, %v37
    %41 = vset.pattern.permute.xlu0 0
    %42 = vperm.xlu0 %41, %v22
    %v43 = vpop.permute.xlu0 %42
    %46 = vset.pattern.permute.xlu0 0
    %47 = vperm.xlu0 %46, %v23
    %v48 = vpop.permute.xlu0 %47
    %vm50 = vcmp.le.f32.partialorder %v37, %v43
    %vm51 = vcmp.le.f32.partialorder %v37, %v48
    %vm52 = vmand %vm38, %vm50
    %vm53 = vmand %vm39, %vm51
    %v54 = vsel %vm52, 1, 0
    %v55 = vsel %vm53, 1, 0
    %v56 = vcvt.s32.f32 %v54
    %v57 = vcvt.s32.f32 %v55
    %v58 = vld [vmem:[%s1] sm:$0xff]
    %vm59 = vcmask 130048
    %v61 = vsel %vm59, %v58, 0
    %63 = vmatprep.subr.mxu0 0.0
    %64 = vmatpush1.msra.mxu0 %v56
    %65 = vmatprep.subr.mxu0 0.0
    %66 = vmatpush1.msra.mxu0 %v57
    %67 = vmatprep.subr.mxu0 0.0
    %68 = vmatpush1.msra.mxu0 0.0
    %69 = vmatprep.subr.mxu0 0.0
    %70 = vmatpush1.msra.mxu0 0.0
    %71 = vmatprep.subr.mxu0 0.0
    %72 = vmatpush1.msra.mxu0 0.0
    %73 = vmatprep.subr.mxu0 0.0
    %74 = vmatpush1.msra.mxu0 0.0
    %75 = vmatprep.subr.mxu0 0.0
    %76 = vmatpush1.msra.mxu0 0.0
    %77 = vmatprep.subr.mxu0 0.0
    %78 = vmatpush1.msra.mxu0 0.0
    %79 = vmatprep.subr.mxu0 0.0
    %80 = vmatpush1.msra.mxu0 0.0
    %81 = vmatprep.subr.mxu0 0.0
    %82 = vmatpush1.msra.mxu0 0.0
    %83 = vmatprep.subr.mxu0 0.0
    %84 = vmatpush1.msra.mxu0 0.0
    %85 = vmatprep.subr.mxu0 0.0
    %86 = vmatpush1.msra.mxu0 0.0
    %87 = vmatprep.subr.mxu0 0.0
    %88 = vmatpush1.msra.mxu0 0.0
    %89 = vmatprep.subr.mxu0 0.0
    %90 = vmatpush1.msra.mxu0 0.0
    %91 = vmatprep.subr.mxu0 0.0
    %92 = vmatpush1.msra.mxu0 0.0
    %93 = vmatprep.subr.mxu0 0.0
    %94 = vmatpush1.msra.mxu0 0.0
    %95 = vmatprep.subr.mxu0 0.0
    %96 = vmatpush1.msra.mxu0 0.0
    %97 = vmatprep.subr.mxu0 0.0
    %98 = vmatpush1.msra.mxu0 0.0
    %99 = vmatprep.subr.mxu0 0.0
    %100 = vmatpush1.msra.mxu0 0.0
    %101 = vmatprep.subr.mxu0 0.0
    %102 = vmatpush1.msra.mxu0 0.0
    %103 = vmatprep.subr.mxu0 0.0
    %104 = vmatpush1.msra.mxu0 0.0
    %105 = vmatprep.subr.mxu0 0.0
    %106 = vmatpush1.msra.mxu0 0.0
    %107 = vmatprep.subr.mxu0 0.0
    %108 = vmatpush1.msra.mxu0 0.0
    %109 = vmatprep.subr.mxu0 0.0
    %110 = vmatpush1.msra.mxu0 0.0
    %111 = vmatprep.subr.mxu0 0.0
    %112 = vmatpush1.msra.mxu0 0.0
    %113 = vmatprep.subr.mxu0 0.0
    %114 = vmatpush1.msra.mxu0 0.0
    %115 = vmatprep.subr.mxu0 0.0
    %116 = vmatpush1.msra.mxu0 0.0
    %117 = vmatprep.subr.mxu0 0.0
    %118 = vmatpush1.msra.mxu0 0.0
    %119 = vmatprep.subr.mxu0 0.0
    %120 = vmatpush1.msra.mxu0 0.0
    %121 = vmatprep.subr.mxu0 0.0
    %122 = vmatpush1.msra.mxu0 0.0
    %123 = vmatprep.subr.mxu0 0.0
    %124 = vmatpush1.msra.mxu0 0.0
    %125 = vmatprep.subr.mxu0 0.0
    %126 = vmatpush1.msra.mxu0 0.0
    %127 = vmatprep.mubr.f32.mxu0 0.0
    %128 = vmatmul.mubr.f32.gmra.mrb[0].mxu0 %v61
    %v129 = vpop.f32.mrb[0].mxu0
    %v130 = vadd.f32 0.0, %v129
    %v131 = vpop.f32.mrb[0].mxu0
    %132 = vdwg.mxu0
    %v134 = vrot.slane %v17, 7
    %v136 = vmul.f32 %v130, %v134
    %v138 = vrot.slane %v136, 1
    %v140 = vadd.f32 %v130, %v138
    %141 = vst [vmem:[%s3] sm:$0x1] %v140
    %v142 = vsub.f32 %v140, %v19
    %v143 = vmul.f32 %v142, %v142
    %v144 = vmul.f32 %v143, %v18
    %vm145 = vcmask 1040384
    %v146 = vsel %vm145, %v144, 0.0
    %147 = vadd.xlane.f32.xlu0 %v146
    %v148 = vpop.xlane.xlu0 %147
    %v149 = vrot.slane %v148, 4
    %v150 = vadd.f32 %v148, %v149
    %v151 = vrot.slane %v150, 2
    %v152 = vadd.f32 %v150, %v151
    %v153 = vrot.slane %v152, 1
    %v154 = vadd.f32 %v152, %v153
    %s155 = vtos %v154
    %v156 = vstv %s155
    %vm157 = vcmask 0
    %158 = vst.msk [vmem:[#allocation2] sm:$0x1] %vm157, %v156
    // Predicated region
    $region14: #{jvp__.29} parent=1 // pred_check
      _
    $region15: #{jvp__.29} parent=1 // pred_check_branch
      %160 = sbr.rel (0) target = $region17
    $region16: #{jvp__.29} parent=1 // pred_region
      _
    $region17: #{jvp__.29} parent=1 // pred_fallthru
      _
    // Predicated region
    $region18: #{jvp__.29} parent=1 // pred_check
      _
    $region19: #{jvp__.29} parent=1 // pred_check_branch
      %162 = sbr.rel (0) target = $region21
    $region20: #{jvp__.29} parent=1 // pred_region
      %s164 = ssub.s32 16, 16
      %165 = vsyncadd [#allocation3], %s164
      %s167 = sshll.u32 [#allocation2], 4
      %s168 = int_to_ptr.vmem [resolvable:$true] %s167
      %170 = dma.vmem_to_hbm [thread:$0]  %s168, 16, %s4, [#allocation3]
    $region21: #{jvp__.29} parent=1 // pred_fallthru
      _
    // Predicated region
    $region22: #{jvp__.29} parent=1 // pred_check
      _
    $region23: #{jvp__.29} parent=1 // pred_check_branch
      %172 = sbr.rel (0) target = $region25
    $region24: #{jvp__.29} parent=1 // pred_region
      _
    $region25: #{jvp__.29} parent=1 // pred_fallthru
      _
    // Predicated region
    $region26: #{jvp__.29} parent=1 // pred_check
      _
    $region27: #{jvp__.29} parent=1 // pred_check_branch
      %174 = sbr.rel (0) target = $region29
    $region28: #{jvp__.29} parent=1 // pred_region
      %175 = dma.done [#allocation3], 16
    $region29: #{jvp__.29} parent=1 // pred_fallthru
      _
    %176 = vsyncpa [#allocation3], 1

</llo_original>
